<compile_context>
chip_gen: v5e
topology: v5e:2x2
jax: 0.10.0
libtpu: 0.0.40
codegen_flags: <defaults>
</compile_context>

<pallas_src>
import functools

import jax
import jax.numpy as jnp
from jax.experimental import pallas as pl
from jax.experimental.pallas import tpu as pltpu

REG_MAX = 16
_OUT_W = 128          # distributions packed per kernel row (lane width)


def _cdiv(a, b):
    return -(-a // b)


def _boxes_dist_kernel(x_ref, w_ref, o_ref, *, reg_max):
    # x_ref: (TR, 128*reg_max) logits; each row = 128 distributions, bin index
    #        is the fast axis.
    # w_ref: (128*reg_max, 256) constant segment matrix (bf16, exact values):
    #        w[i, d]         = 1            if i // reg_max == d   (denominator)
    #        w[i, 128 + d]   = i % reg_max  if i // reg_max == d   (numerator)
    # o_ref: (TR, 128) expected offsets, lane-dense.
    x = x_ref[...].astype(jnp.float32)                      # (TR, L)

    # Shared per-row stabilizer (see numerical note above): keeps exp() <= 1.
    m = jnp.max(x, axis=-1, keepdims=True)                  # (TR, 1)
    e = jnp.exp(x - m)                                      # (TR, L) in (0, 1]

    # Two-pass bf16 split: e == e_hi + e_lo to ~2^-18 relative error, so two
    # DEFAULT-precision bf16 MXU passes reproduce the f32 product accurately
    # (cheaper than precision=HIGH's 3 passes / HIGHEST's 6).
    e_hi = e.astype(jnp.bfloat16)
    e_lo = (e - e_hi.astype(jnp.float32)).astype(jnp.bfloat16)
    w = w_ref[...]                                          # (L, 256) bf16
    t = jnp.dot(e_hi, w, preferred_element_type=jnp.float32)
    t = t + jnp.dot(e_lo, w, preferred_element_type=jnp.float32)   # (TR, 256)

    den = t[:, :_OUT_W]                                     # sum(exp) per dist
    num = t[:, _OUT_W:]                                     # sum(bin * exp)
    # Exact divide on the small (TR, 128) slab (approx reciprocal would cost
    # ~1e-4 relative error on expectations up to reg_max-1).
    o_ref[...] = (num / den).astype(o_ref.dtype)


def _segment_matrix(reg_max):
    """(128*reg_max, 256) matrix: [:, :128] group indicators, [:, 128:] bin weights."""
    L = _OUT_W * reg_max
    idx = jnp.arange(L, dtype=jnp.int32)
    d = idx // reg_max                                      # distribution id in row
    b = (idx % reg_max).astype(jnp.float32)                 # bin value 0..reg_max-1
    cols = jnp.arange(_OUT_W, dtype=jnp.int32)
    den_w = (d[:, None] == cols[None, :]).astype(jnp.float32)       # (L, 128)
    num_w = den_w * b[:, None]                                      # (L, 128)
    # 0/1 and 0..reg_max-1 are exact in bf16; constant-folded by XLA under jit.
    return jnp.concatenate([den_w, num_w], axis=1).astype(jnp.bfloat16)


@functools.partial(jax.jit, static_argnames=("reg_max", "block_rows"))
def boxes_distribution(x, *, reg_max=REG_MAX, block_rows=512):
    """Pallas TPU equivalent of BoxesDistribution.forward."""
    total = 1
    for s in x.shape:
        total *= s
    n = total // reg_max                    # number of distributions
    if n * reg_max != total or n % 4 != 0:
        raise ValueError("input size must be divisible by 4 * reg_max")

    L = _OUT_W * reg_max                    # logits per kernel row (2048 for reg_max=16)
    rows = _cdiv(n, _OUT_W)                 # kernel rows (128 distributions each)

    x_flat = x.reshape(-1)
    pad = rows * L - total
    if pad:
        # Rare unaligned tail (total % (128*reg_max) != 0): one pad copy.
        # The aligned common case is a pure zero-copy reshape (no extra HBM pass).
        # TODO(synk): handle the <128-distribution tail without a full pad copy.
        x_flat = jnp.pad(x_flat, (0, pad))
    x2d = x_flat.reshape(rows, L)           # zero-copy, row-major

    w_mat = _segment_matrix(reg_max)        # (L, 256) bf16 constant

    # Block rows: default 512 -> 4 MiB f32 input per grid step.  If the whole
    # array is smaller, use one full-array block (always a legal block shape).
    tr = min(block_rows, rows)
    if tr != rows:
        tr = max(8, (tr // 8) * 8)          # keep sublane-aligned tiles
    grid = _cdiv(rows, tr)
    # Note: with dimension_semantics=("parallel",) the 1-D grid is sharded
    # across v7x's two TensorCores; large inputs give each core many steps.

    out = pl.pallas_call(
        functools.partial(_boxes_dist_kernel, reg_max=reg_max),
        out_shape=jax.ShapeDtypeStruct((rows, _OUT_W), x.dtype),
        grid_spec=pltpu.PrefetchScalarGridSpec(
            num_scalar_prefetch=0,
            grid=(grid,),
            in_specs=[
                pl.BlockSpec((tr, L), lambda i: (i, 0)),
                # Constant block: same index every step -> fetched once, resident.
                pl.BlockSpec((L, 2 * _OUT_W), lambda i: (0, 0)),
            ],
            out_specs=pl.BlockSpec((tr, _OUT_W), lambda i: (i, 0)),
        ),
        compiler_params=pltpu.CompilerParams(
            dimension_semantics=("parallel",),
            # ~8 MiB input + ~2 MiB W + ~0.5 MiB output buffers + f32/bf16
            # temporaries; 48 MiB leaves headroom and fits every generation
            # (v5e/v6e: 128 MiB physical, v7x: 64 MiB physical).
            vmem_limit_bytes=48 * 1024 * 1024,
        ),
    )(x2d, w_mat)

    # out[r, d] is the expectation of flat distribution r*128 + d, i.e. the
    # original row-major order.  Drop any pad tail and reshape to (-1, 4).
    return out.reshape(-1)[:n].reshape(-1, 4)


def _reference(x, reg_max=REG_MAX):
    x_ = x.reshape(-1, reg_max)
    p = jax.nn.softmax(x_, axis=1)
    proj = jnp.arange(reg_max, dtype=jnp.float32)
    return jnp.sum(p * proj[None, :], axis=1).astype(x.dtype).reshape(-1, 4)


if __name__ == "__main__":
    # Small shape consistent with the module: (batch=2, anchors=8, 4*reg_max=64).
    x_small = jax.random.normal(jax.random.PRNGKey(0), (2, 8, 4 * REG_MAX),
                                dtype=jnp.float32)
    y = jax.block_until_ready(boxes_distribution(x_small))
    y_ref = _reference(x_small)
    assert y.shape == y_ref.shape, (y.shape, y_ref.shape)
    assert jnp.allclose(y, y_ref, atol=1e-4, rtol=1e-4), "mismatch vs reference (small)"

    # Larger case: exercises the aligned zero-copy path and a full-size block.
    x_big = jax.random.normal(jax.random.PRNGKey(1), (8, 640, 4 * REG_MAX),
                              dtype=jnp.float32)
    y2 = jax.block_until_ready(boxes_distribution(x_big))
    y2_ref = _reference(x_big)
    assert y2.shape == y2_ref.shape, (y2.shape, y2_ref.shape)
    assert jnp.allclose(y2, y2_ref, atol=1e-4, rtol=1e-4), "mismatch vs reference (large)"

    print("KERNEL_OK")
</pallas_src>

<mosaic_0001>
module attributes {stable_mosaic.version = 11 : i64} {
  func.func @_boxes_dist_kernel(%arg0: i32, %arg1: memref<1x2048xf32, #tpu.memory_space<vmem>>, %arg2: memref<2048x256xbf16, #tpu.memory_space<vmem>>, %arg3: memref<1x128xf32, #tpu.memory_space<vmem>>) attributes {dimension_semantics = [#tpu.dimension_semantics<parallel>], iteration_bounds = array<i64: 1>, scalar_prefetch = 0 : i64, scratch_operands = 0 : i64, tpu.core_type = #tpu.core_type<tc>, window_params = [{transform_indices = @transform_0, window_bounds = array<i64: 1, 2048>}, {pipeline_mode = #tpu.pipeline_mode<synchronous>, transform_indices = @transform_1, window_bounds = array<i64: 2048, 256>}, {transform_indices = @transform_2, window_bounds = array<i64: 1, 128>}]} {
    %c0 = arith.constant 0 : index
    %c0_0 = arith.constant 0 : index
    %0 = vector.load %arg1[%c0, %c0_0] : memref<1x2048xf32, #tpu.memory_space<vmem>>, vector<1x2048xf32>
    %cst = arith.constant dense<0xFF800000> : vector<1xf32>
    %1 = vector.multi_reduction <maximumf>, %0, %cst [1] : vector<1x2048xf32> to vector<1xf32>
    %2 = vector.shape_cast %1 : vector<1xf32> to vector<1x1xf32>
    %3 = vector.broadcast %2 : vector<1x1xf32> to vector<1x2048xf32>
    %4 = arith.subf %0, %3 : vector<1x2048xf32>
    %5 = math.exp %4 : vector<1x2048xf32>
    %6 = arith.truncf %5 : vector<1x2048xf32> to vector<1x2048xbf16>
    %7 = arith.extf %6 : vector<1x2048xbf16> to vector<1x2048xf32>
    %8 = arith.subf %5, %7 : vector<1x2048xf32>
    %9 = arith.truncf %8 : vector<1x2048xf32> to vector<1x2048xbf16>
    %c0_1 = arith.constant 0 : index
    %c0_2 = arith.constant 0 : index
    %10 = vector.load %arg2[%c0_1, %c0_2] : memref<2048x256xbf16, #tpu.memory_space<vmem>>, vector<2048x256xbf16>
    %cst_3 = arith.constant dense<0.000000e+00> : vector<1x256xf32>
    %11 = tpu.matmul %6, %10, %cst_3 {dimension_numbers = #tpu.dot_dimension_numbers<[1], [0], [0], [1], [0, 0, 1, 1], [], []>} : vector<1x2048xbf16>, vector<2048x256xbf16>, vector<1x256xf32> -> vector<1x256xf32>
    %cst_4 = arith.constant dense<0.000000e+00> : vector<1x256xf32>
    %12 = tpu.matmul %9, %10, %cst_4 {dimension_numbers = #tpu.dot_dimension_numbers<[1], [0], [0], [1], [0, 0, 1, 1], [], []>} : vector<1x2048xbf16>, vector<2048x256xbf16>, vector<1x256xf32> -> vector<1x256xf32>
    %13 = arith.addf %11, %12 : vector<1x256xf32>
    %14 = vector.extract_strided_slice %13 {offsets = [0, 0], sizes = [1, 128], strides = [1, 1]} : vector<1x256xf32> to vector<1x128xf32>
    %15 = vector.extract_strided_slice %13 {offsets = [0, 128], sizes = [1, 128], strides = [1, 1]} : vector<1x256xf32> to vector<1x128xf32>
    %16 = arith.divf %15, %14 : vector<1x128xf32>
    %c0_5 = arith.constant 0 : index
    %c0_6 = arith.constant 0 : index
    %17 = vector.load %arg3[%c0_5, %c0_6] : memref<1x128xf32, #tpu.memory_space<vmem>>, vector<1x128xf32>
    tpu.vector_store %arg3[%c0_5, %c0_6], %16 {strides = array<i32>} : memref<1x128xf32, #tpu.memory_space<vmem>>, vector<1x128xf32>,
    return
  }
  func.func @transform_0(%arg0: i32) -> (i32, i32) {
    %c0_i32 = arith.constant 0 : i32
    %c0_i32_0 = arith.constant 0 : i32
    return %arg0, %c0_i32 : i32, i32
  }
  func.func @transform_1(%arg0: i32) -> (i32, i32) {
    %c0_i32 = arith.constant 0 : i32
    %c0_i32_0 = arith.constant 0 : i32
    %c0_i32_1 = arith.constant 0 : i32
    return %c0_i32, %c0_i32_0 : i32, i32
  }
  func.func @transform_2(%arg0: i32) -> (i32, i32) {
    %c0_i32 = arith.constant 0 : i32
    %c0_i32_0 = arith.constant 0 : i32
    return %arg0, %c0_i32 : i32, i32
  }
}

</mosaic_0001>

<llo_original>
// kernel: boxes_distribution.1
$region0: #{boxes_distribution.1}
  #allocation0 [shape = 'u32[]', space=smem, size = 0x4, offset = 0x4, fixed_abs, tag = 'smem constant byte address 0x4 - core index']
  #allocation1 [shape = 'u32[72,128]{1,0:T(1,128)}', space=vmem, size = 0x9000, scoped, tag = 'internal scratch']
  %s0 = inlined_call_operand.vmem [shape: f32[1,2048], index: 0, kind: input, shape index: {}]
  %s1 = inlined_call_operand.vmem [shape: bf16[2048,256], index: 1, kind: input, shape index: {}]
  %s2 = inlined_call_operand.vmem [shape: f32[1,128], index: 2, kind: output, shape index: {}]
  %s3 = sld [smem:[#allocation0]]
  $region18: #{boxes_distribution.1} parent=0
    _
  %s5 = ssub.s32 1, %s3
  %s6 = scalar_select 0, %s5, %s3
  // Predicated region
  $region2: #{boxes_distribution.1} parent=0 // pred_check
    _
  $region3: #{boxes_distribution.1} parent=0 // pred_check_branch
    %8 = sbr.rel (0) target = $region5
  $region4: #{boxes_distribution.1} parent=0 // pred_region
    _
  $region5: #{boxes_distribution.1} parent=0 // pred_fallthru
    _
  // Predicated region
  $region6: #{boxes_distribution.1} parent=0 // pred_check
    _
  $region7: #{boxes_distribution.1} parent=0 // pred_check_branch
    %10 = sbr.rel (0) target = $region9
  $region8: #{boxes_distribution.1} parent=0 // pred_region
    _
  $region9: #{boxes_distribution.1} parent=0 // pred_fallthru
    _
  %v11 = vld [vmem:[%s0] sm:$0xff]
  %v12 = vld [vmem:[%s0 + $0x8] sm:$0xff]
  %v15 = vperm.slane %v11, 0
  %v16 = vperm.slane %v11, 1
  %v17 = vperm.slane %v11, 2
  %v18 = vperm.slane %v11, 3
  %v19 = vperm.slane %v11, 4
  %v20 = vperm.slane %v11, 5
  %v21 = vperm.slane %v11, 6
  %v22 = vperm.slane %v11, 7
  %v23 = vperm.slane %v12, 0
  %v24 = vperm.slane %v12, 1
  %v25 = vperm.slane %v12, 2
  %v26 = vperm.slane %v12, 3
  %v27 = vperm.slane %v12, 4
  %v28 = vperm.slane %v12, 5
  %v29 = vperm.slane %v12, 6
  %v30 = vperm.slane %v12, 7
  %vm47 = vcmask 1040384
  %v48 = vsel %vm47, %v15, -inf
  %v49 = vsel %vm47, %v16, -inf
  %v50 = vsel %vm47, %v17, -inf
  %v51 = vsel %vm47, %v18, -inf
  %v52 = vsel %vm47, %v19, -inf
  %v53 = vmax.f32 %v48, %v52
  %v54 = vsel %vm47, %v20, -inf
  %v55 = vmax.f32 %v49, %v54
  %v56 = vsel %vm47, %v21, -inf
  %v57 = vmax.f32 %v50, %v56
  %v58 = vsel %vm47, %v22, -inf
  %v59 = vmax.f32 %v51, %v58
  %v60 = vsel %vm47, %v23, -inf
  %v61 = vmax.f32 %v53, %v60
  %v62 = vsel %vm47, %v24, -inf
  %v63 = vmax.f32 %v55, %v62
  %v64 = vsel %vm47, %v25, -inf
  %v65 = vmax.f32 %v57, %v64
  %v66 = vsel %vm47, %v26, -inf
  %v67 = vmax.f32 %v59, %v66
  %v68 = vsel %vm47, %v27, -inf
  %v69 = vmax.f32 %v61, %v68
  %v70 = vsel %vm47, %v28, -inf
  %v71 = vmax.f32 %v63, %v70
  %v72 = vsel %vm47, %v29, -inf
  %v73 = vmax.f32 %v65, %v72
  %v74 = vsel %vm47, %v30, -inf
  %v75 = vmax.f32 %v67, %v74
  %v76 = vmax.f32 %v69, %v71
  %v77 = vmax.f32 %v73, %v75
  %v78 = vmax.f32 %v76, %v77
  %79 = vmax.xlane.f32.xlu0 %v78
  %v80 = vpop.xlane.xlu0 %79
  %v82 = vperm.slane %v80, 0
  %v84 = vsub.f32 %v11, %v82
  %v85 = vsub.f32 %v12, %v82
  %v86 = vmul.f32 %v84, 1.442695
  %v87 = vpow.pop %v86
  %v88 = vmul.f32 %v85, 1.442695
  %v89 = vpow.pop %v88
  %v92 = vperm.slane %v87, 0
  %v93 = vperm.slane %v87, 1
  %v94 = vperm.slane %v87, 2
  %v95 = vperm.slane %v87, 3
  %v96 = vperm.slane %v87, 4
  %v97 = vperm.slane %v87, 5
  %v98 = vperm.slane %v87, 6
  %v99 = vperm.slane %v87, 7
  %v100 = vperm.slane %v89, 0
  %v101 = vperm.slane %v89, 1
  %v102 = vperm.slane %v89, 2
  %v103 = vperm.slane %v89, 3
  %v104 = vperm.slane %v89, 4
  %v105 = vperm.slane %v89, 5
  %v106 = vperm.slane %v89, 6
  %v107 = vperm.slane %v89, 7
  %v124 = vpack.c.bf16 %v93, %v92
  %v125 = vpack.c.bf16 %v95, %v94
  %v126 = vpack.c.bf16 %v97, %v96
  %v127 = vpack.c.bf16 %v99, %v98
  %v128 = vpack.c.bf16 %v101, %v100
  %v129 = vpack.c.bf16 %v103, %v102
  %v130 = vpack.c.bf16 %v105, %v104
  %v131 = vpack.c.bf16 %v107, %v106
  %v132 = vunpack.c.l.bf16 %v124
  %v133 = vunpack.c.h.bf16 %v124
  %v134 = vunpack.c.l.bf16 %v125
  %v135 = vunpack.c.h.bf16 %v125
  %v136 = vunpack.c.l.bf16 %v126
  %v137 = vunpack.c.h.bf16 %v126
  %v138 = vunpack.c.l.bf16 %v127
  %v139 = vunpack.c.h.bf16 %v127
  %v140 = vunpack.c.l.bf16 %v128
  %v141 = vunpack.c.h.bf16 %v128
  %v142 = vunpack.c.l.bf16 %v129
  %v143 = vunpack.c.h.bf16 %v129
  %v144 = vunpack.c.l.bf16 %v130
  %v145 = vunpack.c.h.bf16 %v130
  %v146 = vunpack.c.l.bf16 %v131
  %v147 = vunpack.c.h.bf16 %v131
  %v164 = vrot.slane %v133, 7
  %v165 = vrot.slane %v134, 6
  %v166 = vrot.slane %v135, 5
  %v167 = vrot.slane %v136, 4
  %v168 = vrot.slane %v137, 3
  %v169 = vrot.slane %v138, 2
  %v170 = vrot.slane %v139, 1
  %v171 = vrot.slane %v141, 7
  %v172 = vrot.slane %v142, 6
  %v173 = vrot.slane %v143, 5
  %v174 = vrot.slane %v144, 4
  %v175 = vrot.slane %v145, 3
  %v176 = vrot.slane %v146, 2
  %v177 = vrot.slane %v147, 1
  %v178 = vsel %vm47, %v132, %v164
  %vm179 = vcmask 1042434
  %v180 = vsel %vm179, %v165, %v166
  %vm181 = vcmask 1041408
  %v182 = vsel %vm181, %v178, %v180
  %vm183 = vcmask 1044484
  %v184 = vsel %vm183, %v167, %v168
  %vm185 = vcmask 1046534
  %v186 = vsel %vm185, %v169, %v170
  %vm187 = vcmask 1045508
  %v188 = vsel %vm187, %v184, %v186
  %vm189 = vcmask 1043456
  %v190 = vsel %vm189, %v182, %v188
  %v191 = vsel %vm47, %v140, %v171
  %v192 = vsel %vm179, %v172, %v173
  %v193 = vsel %vm181, %v191, %v192
  %v194 = vsel %vm183, %v174, %v175
  %v195 = vsel %vm185, %v176, %v177
  %v196 = vsel %vm187, %v194, %v195
  %v197 = vsel %vm189, %v193, %v196
  %v200 = vsub.f32 %v87, %v190
  %v201 = vsub.f32 %v89, %v197
  %v204 = vperm.slane %v200, 0
  %v205 = vperm.slane %v200, 1
  %v206 = vperm.slane %v200, 2
  %v207 = vperm.slane %v200, 3
  %v208 = vperm.slane %v200, 4
  %v209 = vperm.slane %v200, 5
  %v210 = vperm.slane %v200, 6
  %v211 = vperm.slane %v200, 7
  %v212 = vperm.slane %v201, 0
  %v213 = vperm.slane %v201, 1
  %v214 = vperm.slane %v201, 2
  %v215 = vperm.slane %v201, 3
  %v216 = vperm.slane %v201, 4
  %v217 = vperm.slane %v201, 5
  %v218 = vperm.slane %v201, 6
  %v219 = vperm.slane %v201, 7
  %v236 = vpack.c.bf16 %v204, %v204
  %v237 = vpack.c.bf16 %v205, %v205
  %v238 = vpack.c.bf16 %v206, %v206
  %v239 = vpack.c.bf16 %v207, %v207
  %v240 = vpack.c.bf16 %v208, %v208
  %v241 = vpack.c.bf16 %v209, %v209
  %v242 = vpack.c.bf16 %v210, %v210
  %v243 = vpack.c.bf16 %v211, %v211
  %v244 = vpack.c.bf16 %v212, %v212
  %v245 = vpack.c.bf16 %v213, %v213
  %v246 = vpack.c.bf16 %v214, %v214
  %v247 = vpack.c.bf16 %v215, %v215
  %v248 = vpack.c.bf16 %v216, %v216
  %v249 = vpack.c.bf16 %v217, %v217
  %v250 = vpack.c.bf16 %v218, %v218
  %v251 = vpack.c.bf16 %v219, %v219
  %v252 = vld [vmem:[%s1] sm:$0xff]
  %v253 = vld [vmem:[%s1 + $0x8] sm:$0xff]
  %v254 = vld [vmem:[%s1 + $0x10] sm:$0xff]
  %v255 = vld [vmem:[%s1 + $0x18] sm:$0xff]
  %v256 = vld [vmem:[%s1 + $0x20] sm:$0xff]
  %v257 = vld [vmem:[%s1 + $0x28] sm:$0xff]
  %v258 = vld [vmem:[%s1 + $0x30] sm:$0xff]
  %v259 = vld [vmem:[%s1 + $0x38] sm:$0xff]
  %v260 = vld [vmem:[%s1 + $0x40] sm:$0xff]
  %v261 = vld [vmem:[%s1 + $0x48] sm:$0xff]
  %v262 = vld [vmem:[%s1 + $0x50] sm:$0xff]
  %v263 = vld [vmem:[%s1 + $0x58] sm:$0xff]
  %v264 = vld [vmem:[%s1 + $0x60] sm:$0xff]
  %v265 = vld [vmem:[%s1 + $0x68] sm:$0xff]
  %v266 = vld [vmem:[%s1 + $0x70] sm:$0xff]
  %v267 = vld [vmem:[%s1 + $0x78] sm:$0xff]
  %v268 = vld [vmem:[%s1 + $0x80] sm:$0xff]
  %v269 = vld [vmem:[%s1 + $0x88] sm:$0xff]
  %v270 = vld [vmem:[%s1 + $0x90] sm:$0xff]
  %v271 = vld [vmem:[%s1 + $0x98] sm:$0xff]
  %v272 = vld [vmem:[%s1 + $0xa0] sm:$0xff]
  %v273 = vld [vmem:[%s1 + $0xa8] sm:$0xff]
  %v274 = vld [vmem:[%s1 + $0xb0] sm:$0xff]
  %v275 = vld [vmem:[%s1 + $0xb8] sm:$0xff]
  %v276 = vld [vmem:[%s1 + $0xc0] sm:$0xff]
  %v277 = vld [vmem:[%s1 + $0xc8] sm:$0xff]
  %v278 = vld [vmem:[%s1 + $0xd0] sm:$0xff]
  %v279 = vld [vmem:[%s1 + $0xd8] sm:$0xff]
  %v280 = vld [vmem:[%s1 + $0xe0] sm:$0xff]
  %v281 = vld [vmem:[%s1 + $0xe8] sm:$0xff]
  %v282 = vld [vmem:[%s1 + $0xf0] sm:$0xff]
  %v283 = vld [vmem:[%s1 + $0xf8] sm:$0xff]
  %v284 = vld [vmem:[%s1 + $0x100] sm:$0xff]
  %v285 = vld [vmem:[%s1 + $0x108] sm:$0xff]
  %v286 = vld [vmem:[%s1 + $0x110] sm:$0xff]
  %v287 = vld [vmem:[%s1 + $0x118] sm:$0xff]
  %v288 = vld [vmem:[%s1 + $0x120] sm:$0xff]
  %v289 = vld [vmem:[%s1 + $0x128] sm:$0xff]
  %v290 = vld [vmem:[%s1 + $0x130] sm:$0xff]
  %v291 = vld [vmem:[%s1 + $0x138] sm:$0xff]
  %v292 = vld [vmem:[%s1 + $0x140] sm:$0xff]
  %v293 = vld [vmem:[%s1 + $0x148] sm:$0xff]
  %v294 = vld [vmem:[%s1 + $0x150] sm:$0xff]
  %v295 = vld [vmem:[%s1 + $0x158] sm:$0xff]
  %v296 = vld [vmem:[%s1 + $0x160] sm:$0xff]
  %v297 = vld [vmem:[%s1 + $0x168] sm:$0xff]
  %v298 = vld [vmem:[%s1 + $0x170] sm:$0xff]
  %v299 = vld [vmem:[%s1 + $0x178] sm:$0xff]
  %v300 = vld [vmem:[%s1 + $0x180] sm:$0xff]
  %v301 = vld [vmem:[%s1 + $0x188] sm:$0xff]
  %v302 = vld [vmem:[%s1 + $0x190] sm:$0xff]
  %v303 = vld [vmem:[%s1 + $0x198] sm:$0xff]
  %v304 = vld [vmem:[%s1 + $0x1a0] sm:$0xff]
  %v305 = vld [vmem:[%s1 + $0x1a8] sm:$0xff]
  %v306 = vld [vmem:[%s1 + $0x1b0] sm:$0xff]
  %v307 = vld [vmem:[%s1 + $0x1b8] sm:$0xff]
  %v308 = vld [vmem:[%s1 + $0x1c0] sm:$0xff]
  %v309 = vld [vmem:[%s1 + $0x1c8] sm:$0xff]
  %v310 = vld [vmem:[%s1 + $0x1d0] sm:$0xff]
  %v311 = vld [vmem:[%s1 + $0x1d8] sm:$0xff]
  %v312 = vld [vmem:[%s1 + $0x1e0] sm:$0xff]
  %v313 = vld [vmem:[%s1 + $0x1e8] sm:$0xff]
  %v314 = vld [vmem:[%s1 + $0x1f0] sm:$0xff]
  %v315 = vld [vmem:[%s1 + $0x1f8] sm:$0xff]
  %v316 = vld [vmem:[%s1 + $0x200] sm:$0xff]
  %v317 = vld [vmem:[%s1 + $0x208] sm:$0xff]
  %v318 = vld [vmem:[%s1 + $0x210] sm:$0xff]
  %v319 = vld [vmem:[%s1 + $0x218] sm:$0xff]
  %v320 = vld [vmem:[%s1 + $0x220] sm:$0xff]
  %v321 = vld [vmem:[%s1 + $0x228] sm:$0xff]
  %v322 = vld [vmem:[%s1 + $0x230] sm:$0xff]
  %v323 = vld [vmem:[%s1 + $0x238] sm:$0xff]
  %v324 = vld [vmem:[%s1 + $0x240] sm:$0xff]
  %v325 = vld [vmem:[%s1 + $0x248] sm:$0xff]
  %v326 = vld [vmem:[%s1 + $0x250] sm:$0xff]
  %v327 = vld [vmem:[%s1 + $0x258] sm:$0xff]
  %v328 = vld [vmem:[%s1 + $0x260] sm:$0xff]
  %v329 = vld [vmem:[%s1 + $0x268] sm:$0xff]
  %v330 = vld [vmem:[%s1 + $0x270] sm:$0xff]
  %v331 = vld [vmem:[%s1 + $0x278] sm:$0xff]
  %v332 = vld [vmem:[%s1 + $0x280] sm:$0xff]
  %v333 = vld [vmem:[%s1 + $0x288] sm:$0xff]
  %v334 = vld [vmem:[%s1 + $0x290] sm:$0xff]
  %v335 = vld [vmem:[%s1 + $0x298] sm:$0xff]
  %v336 = vld [vmem:[%s1 + $0x2a0] sm:$0xff]
  %v337 = vld [vmem:[%s1 + $0x2a8] sm:$0xff]
  %v338 = vld [vmem:[%s1 + $0x2b0] sm:$0xff]
  %v339 = vld [vmem:[%s1 + $0x2b8] sm:$0xff]
  %v340 = vld [vmem:[%s1 + $0x2c0] sm:$0xff]
  %v341 = vld [vmem:[%s1 + $0x2c8] sm:$0xff]
  %v342 = vld [vmem:[%s1 + $0x2d0] sm:$0xff]
  %v343 = vld [vmem:[%s1 + $0x2d8] sm:$0xff]
  %v344 = vld [vmem:[%s1 + $0x2e0] sm:$0xff]
  %v345 = vld [vmem:[%s1 + $0x2e8] sm:$0xff]
  %v346 = vld [vmem:[%s1 + $0x2f0] sm:$0xff]
  %v347 = vld [vmem:[%s1 + $0x2f8] sm:$0xff]
  %v348 = vld [vmem:[%s1 + $0x300] sm:$0xff]
  %v349 = vld [vmem:[%s1 + $0x308] sm:$0xff]
  %v350 = vld [vmem:[%s1 + $0x310] sm:$0xff]
  %v351 = vld [vmem:[%s1 + $0x318] sm:$0xff]
  %v352 = vld [vmem:[%s1 + $0x320] sm:$0xff]
  %v353 = vld [vmem:[%s1 + $0x328] sm:$0xff]
  %v354 = vld [vmem:[%s1 + $0x330] sm:$0xff]
  %v355 = vld [vmem:[%s1 + $0x338] sm:$0xff]
  %v356 = vld [vmem:[%s1 + $0x340] sm:$0xff]
  %v357 = vld [vmem:[%s1 + $0x348] sm:$0xff]
  %v358 = vld [vmem:[%s1 + $0x350] sm:$0xff]
  %v359 = vld [vmem:[%s1 + $0x358] sm:$0xff]
  %v360 = vld [vmem:[%s1 + $0x360] sm:$0xff]
  %v361 = vld [vmem:[%s1 + $0x368] sm:$0xff]
  %v362 = vld [vmem:[%s1 + $0x370] sm:$0xff]
  %v363 = vld [vmem:[%s1 + $0x378] sm:$0xff]
  %v364 = vld [vmem:[%s1 + $0x380] sm:$0xff]
  %v365 = vld [vmem:[%s1 + $0x388] sm:$0xff]
  %v366 = vld [vmem:[%s1 + $0x390] sm:$0xff]
  %v367 = vld [vmem:[%s1 + $0x398] sm:$0xff]
  %v368 = vld [vmem:[%s1 + $0x3a0] sm:$0xff]
  %v369 = vld [vmem:[%s1 + $0x3a8] sm:$0xff]
  %v370 = vld [vmem:[%s1 + $0x3b0] sm:$0xff]
  %v371 = vld [vmem:[%s1 + $0x3b8] sm:$0xff]
  %v372 = vld [vmem:[%s1 + $0x3c0] sm:$0xff]
  %v373 = vld [vmem:[%s1 + $0x3c8] sm:$0xff]
  %v374 = vld [vmem:[%s1 + $0x3d0] sm:$0xff]
  %v375 = vld [vmem:[%s1 + $0x3d8] sm:$0xff]
  %v376 = vld [vmem:[%s1 + $0x3e0] sm:$0xff]
  %v377 = vld [vmem:[%s1 + $0x3e8] sm:$0xff]
  %v378 = vld [vmem:[%s1 + $0x3f0] sm:$0xff]
  %v379 = vld [vmem:[%s1 + $0x3f8] sm:$0xff]
  %v380 = vld [vmem:[%s1 + $0x400] sm:$0xff]
  %v381 = vld [vmem:[%s1 + $0x408] sm:$0xff]
  %v382 = vld [vmem:[%s1 + $0x410] sm:$0xff]
  %v383 = vld [vmem:[%s1 + $0x418] sm:$0xff]
  %v384 = vld [vmem:[%s1 + $0x420] sm:$0xff]
  %v385 = vld [vmem:[%s1 + $0x428] sm:$0xff]
  %v386 = vld [vmem:[%s1 + $0x430] sm:$0xff]
  %v387 = vld [vmem:[%s1 + $0x438] sm:$0xff]
  %v388 = vld [vmem:[%s1 + $0x440] sm:$0xff]
  %v389 = vld [vmem:[%s1 + $0x448] sm:$0xff]
  %v390 = vld [vmem:[%s1 + $0x450] sm:$0xff]
  %v391 = vld [vmem:[%s1 + $0x458] sm:$0xff]
  %v392 = vld [vmem:[%s1 + $0x460] sm:$0xff]
  %v393 = vld [vmem:[%s1 + $0x468] sm:$0xff]
  %v394 = vld [vmem:[%s1 + $0x470] sm:$0xff]
  %v395 = vld [vmem:[%s1 + $0x478] sm:$0xff]
  %v396 = vld [vmem:[%s1 + $0x480] sm:$0xff]
  %v397 = vld [vmem:[%s1 + $0x488] sm:$0xff]
  %v398 = vld [vmem:[%s1 + $0x490] sm:$0xff]
  %v399 = vld [vmem:[%s1 + $0x498] sm:$0xff]
  %v400 = vld [vmem:[%s1 + $0x4a0] sm:$0xff]
  %v401 = vld [vmem:[%s1 + $0x4a8] sm:$0xff]
  %v402 = vld [vmem:[%s1 + $0x4b0] sm:$0xff]
  %v403 = vld [vmem:[%s1 + $0x4b8] sm:$0xff]
  %v404 = vld [vmem:[%s1 + $0x4c0] sm:$0xff]
  %v405 = vld [vmem:[%s1 + $0x4c8] sm:$0xff]
  %v406 = vld [vmem:[%s1 + $0x4d0] sm:$0xff]
  %v407 = vld [vmem:[%s1 + $0x4d8] sm:$0xff]
  %v408 = vld [vmem:[%s1 + $0x4e0] sm:$0xff]
  %v409 = vld [vmem:[%s1 + $0x4e8] sm:$0xff]
  %v410 = vld [vmem:[%s1 + $0x4f0] sm:$0xff]
  %v411 = vld [vmem:[%s1 + $0x4f8] sm:$0xff]
  %v412 = vld [vmem:[%s1 + $0x500] sm:$0xff]
  %v413 = vld [vmem:[%s1 + $0x508] sm:$0xff]
  %v414 = vld [vmem:[%s1 + $0x510] sm:$0xff]
  %v415 = vld [vmem:[%s1 + $0x518] sm:$0xff]
  %v416 = vld [vmem:[%s1 + $0x520] sm:$0xff]
  %v417 = vld [vmem:[%s1 + $0x528] sm:$0xff]
  %v418 = vld [vmem:[%s1 + $0x530] sm:$0xff]
  %v419 = vld [vmem:[%s1 + $0x538] sm:$0xff]
  %v420 = vld [vmem:[%s1 + $0x540] sm:$0xff]
  %v421 = vld [vmem:[%s1 + $0x548] sm:$0xff]
  %v422 = vld [vmem:[%s1 + $0x550] sm:$0xff]
  %v423 = vld [vmem:[%s1 + $0x558] sm:$0xff]
  %v424 = vld [vmem:[%s1 + $0x560] sm:$0xff]
  %v425 = vld [vmem:[%s1 + $0x568] sm:$0xff]
  %v426 = vld [vmem:[%s1 + $0x570] sm:$0xff]
  %v427 = vld [vmem:[%s1 + $0x578] sm:$0xff]
  %v428 = vld [vmem:[%s1 + $0x580] sm:$0xff]
  %v429 = vld [vmem:[%s1 + $0x588] sm:$0xff]
  %v430 = vld [vmem:[%s1 + $0x590] sm:$0xff]
  %v431 = vld [vmem:[%s1 + $0x598] sm:$0xff]
  %v432 = vld [vmem:[%s1 + $0x5a0] sm:$0xff]
  %v433 = vld [vmem:[%s1 + $0x5a8] sm:$0xff]
  %v434 = vld [vmem:[%s1 + $0x5b0] sm:$0xff]
  %v435 = vld [vmem:[%s1 + $0x5b8] sm:$0xff]
  %v436 = vld [vmem:[%s1 + $0x5c0] sm:$0xff]
  %v437 = vld [vmem:[%s1 + $0x5c8] sm:$0xff]
  %v438 = vld [vmem:[%s1 + $0x5d0] sm:$0xff]
  %v439 = vld [vmem:[%s1 + $0x5d8] sm:$0xff]
  %v440 = vld [vmem:[%s1 + $0x5e0] sm:$0xff]
  %v441 = vld [vmem:[%s1 + $0x5e8] sm:$0xff]
  %v442 = vld [vmem:[%s1 + $0x5f0] sm:$0xff]
  %v443 = vld [vmem:[%s1 + $0x5f8] sm:$0xff]
  %v444 = vld [vmem:[%s1 + $0x600] sm:$0xff]
  %v445 = vld [vmem:[%s1 + $0x608] sm:$0xff]
  %v446 = vld [vmem:[%s1 + $0x610] sm:$0xff]
  %v447 = vld [vmem:[%s1 + $0x618] sm:$0xff]
  %v448 = vld [vmem:[%s1 + $0x620] sm:$0xff]
  %v449 = vld [vmem:[%s1 + $0x628] sm:$0xff]
  %v450 = vld [vmem:[%s1 + $0x630] sm:$0xff]
  %v451 = vld [vmem:[%s1 + $0x638] sm:$0xff]
  %v452 = vld [vmem:[%s1 + $0x640] sm:$0xff]
  %v453 = vld [vmem:[%s1 + $0x648] sm:$0xff]
  %v454 = vld [vmem:[%s1 + $0x650] sm:$0xff]
  %v455 = vld [vmem:[%s1 + $0x658] sm:$0xff]
  %v456 = vld [vmem:[%s1 + $0x660] sm:$0xff]
  %v457 = vld [vmem:[%s1 + $0x668] sm:$0xff]
  %v458 = vld [vmem:[%s1 + $0x670] sm:$0xff]
  %v459 = vld [vmem:[%s1 + $0x678] sm:$0xff]
  %v460 = vld [vmem:[%s1 + $0x680] sm:$0xff]
  %v461 = vld [vmem:[%s1 + $0x688] sm:$0xff]
  %v462 = vld [vmem:[%s1 + $0x690] sm:$0xff]
  %v463 = vld [vmem:[%s1 + $0x698] sm:$0xff]
  %v464 = vld [vmem:[%s1 + $0x6a0] sm:$0xff]
  %v465 = vld [vmem:[%s1 + $0x6a8] sm:$0xff]
  %v466 = vld [vmem:[%s1 + $0x6b0] sm:$0xff]
  %v467 = vld [vmem:[%s1 + $0x6b8] sm:$0xff]
  %v468 = vld [vmem:[%s1 + $0x6c0] sm:$0xff]
  %v469 = vld [vmem:[%s1 + $0x6c8] sm:$0xff]
  %v470 = vld [vmem:[%s1 + $0x6d0] sm:$0xff]
  %v471 = vld [vmem:[%s1 + $0x6d8] sm:$0xff]
  %v472 = vld [vmem:[%s1 + $0x6e0] sm:$0xff]
  %v473 = vld [vmem:[%s1 + $0x6e8] sm:$0xff]
  %v474 = vld [vmem:[%s1 + $0x6f0] sm:$0xff]
  %v475 = vld [vmem:[%s1 + $0x6f8] sm:$0xff]
  %v476 = vld [vmem:[%s1 + $0x700] sm:$0xff]
  %v477 = vld [vmem:[%s1 + $0x708] sm:$0xff]
  %v478 = vld [vmem:[%s1 + $0x710] sm:$0xff]
  %v479 = vld [vmem:[%s1 + $0x718] sm:$0xff]
  %v480 = vld [vmem:[%s1 + $0x720] sm:$0xff]
  %v481 = vld [vmem:[%s1 + $0x728] sm:$0xff]
  %v482 = vld [vmem:[%s1 + $0x730] sm:$0xff]
  %v483 = vld [vmem:[%s1 + $0x738] sm:$0xff]
  %v484 = vld [vmem:[%s1 + $0x740] sm:$0xff]
  %v485 = vld [vmem:[%s1 + $0x748] sm:$0xff]
  %v486 = vld [vmem:[%s1 + $0x750] sm:$0xff]
  %v487 = vld [vmem:[%s1 + $0x758] sm:$0xff]
  %v488 = vld [vmem:[%s1 + $0x760] sm:$0xff]
  %v489 = vld [vmem:[%s1 + $0x768] sm:$0xff]
  %v490 = vld [vmem:[%s1 + $0x770] sm:$0xff]
  %v491 = vld [vmem:[%s1 + $0x778] sm:$0xff]
  %v492 = vld [vmem:[%s1 + $0x780] sm:$0xff]
  %v493 = vld [vmem:[%s1 + $0x788] sm:$0xff]
  %v494 = vld [vmem:[%s1 + $0x790] sm:$0xff]
  %v495 = vld [vmem:[%s1 + $0x798] sm:$0xff]
  %v496 = vld [vmem:[%s1 + $0x7a0] sm:$0xff]
  %v497 = vld [vmem:[%s1 + $0x7a8] sm:$0xff]
  %v498 = vld [vmem:[%s1 + $0x7b0] sm:$0xff]
  %v499 = vld [vmem:[%s1 + $0x7b8] sm:$0xff]
  %v500 = vld [vmem:[%s1 + $0x7c0] sm:$0xff]
  %v501 = vld [vmem:[%s1 + $0x7c8] sm:$0xff]
  %v502 = vld [vmem:[%s1 + $0x7d0] sm:$0xff]
  %v503 = vld [vmem:[%s1 + $0x7d8] sm:$0xff]
  %v504 = vld [vmem:[%s1 + $0x7e0] sm:$0xff]
  %v505 = vld [vmem:[%s1 + $0x7e8] sm:$0xff]
  %v506 = vld [vmem:[%s1 + $0x7f0] sm:$0xff]
  %v507 = vld [vmem:[%s1 + $0x7f8] sm:$0xff]
  %v764 = vunpack.c.l.b16 %v252
  %v765 = vunpack.c.h.b16 %v252
  %v766 = vunpack.c.l.b16 %v253
  %v767 = vunpack.c.h.b16 %v253
  %v768 = vunpack.c.l.b16 %v254
  %v769 = vunpack.c.h.b16 %v254
  %v770 = vunpack.c.l.b16 %v255
  %v771 = vunpack.c.h.b16 %v255
  %v772 = vunpack.c.l.b16 %v256
  %v773 = vunpack.c.h.b16 %v256
  %v774 = vunpack.c.l.b16 %v257
  %v775 = vunpack.c.h.b16 %v257
  %v776 = vunpack.c.l.b16 %v258
  %v777 = vunpack.c.h.b16 %v258
  %v778 = vunpack.c.l.b16 %v259
  %v779 = vunpack.c.h.b16 %v259
  %v780 = vunpack.c.l.b16 %v260
  %v781 = vunpack.c.h.b16 %v260
  %v782 = vunpack.c.l.b16 %v261
  %v783 = vunpack.c.h.b16 %v261
  %v784 = vunpack.c.l.b16 %v262
  %v785 = vunpack.c.h.b16 %v262
  %v786 = vunpack.c.l.b16 %v263
  %v787 = vunpack.c.h.b16 %v263
  %v788 = vunpack.c.l.b16 %v264
  %v789 = vunpack.c.h.b16 %v264
  %v790 = vunpack.c.l.b16 %v265
  %v791 = vunpack.c.h.b16 %v265
  %v792 = vunpack.c.l.b16 %v266
  %v793 = vunpack.c.h.b16 %v266
  %v794 = vunpack.c.l.b16 %v267
  %v795 = vunpack.c.h.b16 %v267
  %v796 = vunpack.c.l.b16 %v268
  %v797 = vunpack.c.h.b16 %v268
  %v798 = vunpack.c.l.b16 %v269
  %v799 = vunpack.c.h.b16 %v269
  %v800 = vunpack.c.l.b16 %v270
  %v801 = vunpack.c.h.b16 %v270
  %v802 = vunpack.c.l.b16 %v271
  %v803 = vunpack.c.h.b16 %v271
  %v804 = vunpack.c.l.b16 %v272
  %v805 = vunpack.c.h.b16 %v272
  %v806 = vunpack.c.l.b16 %v273
  %v807 = vunpack.c.h.b16 %v273
  %v808 = vunpack.c.l.b16 %v274
  %v809 = vunpack.c.h.b16 %v274
  %v810 = vunpack.c.l.b16 %v275
  %v811 = vunpack.c.h.b16 %v275
  %v812 = vunpack.c.l.b16 %v276
  %v813 = vunpack.c.h.b16 %v276
  %v814 = vunpack.c.l.b16 %v277
  %v815 = vunpack.c.h.b16 %v277
  %v816 = vunpack.c.l.b16 %v278
  %v817 = vunpack.c.h.b16 %v278
  %v818 = vunpack.c.l.b16 %v279
  %v819 = vunpack.c.h.b16 %v279
  %v820 = vunpack.c.l.b16 %v280
  %v821 = vunpack.c.h.b16 %v280
  %v822 = vunpack.c.l.b16 %v281
  %v823 = vunpack.c.h.b16 %v281
  %v824 = vunpack.c.l.b16 %v282
  %v825 = vunpack.c.h.b16 %v282
  %v826 = vunpack.c.l.b16 %v283
  %v827 = vunpack.c.h.b16 %v283
  %v828 = vunpack.c.l.b16 %v284
  %v829 = vunpack.c.h.b16 %v284
  %v830 = vunpack.c.l.b16 %v285
  %v831 = vunpack.c.h.b16 %v285
  %v832 = vunpack.c.l.b16 %v286
  %v833 = vunpack.c.h.b16 %v286
  %v834 = vunpack.c.l.b16 %v287
  %v835 = vunpack.c.h.b16 %v287
  %v836 = vunpack.c.l.b16 %v288
  %v837 = vunpack.c.h.b16 %v288
  %v838 = vunpack.c.l.b16 %v289
  %v839 = vunpack.c.h.b16 %v289
  %v840 = vunpack.c.l.b16 %v290
  %v841 = vunpack.c.h.b16 %v290
  %v842 = vunpack.c.l.b16 %v291
  %v843 = vunpack.c.h.b16 %v291
  %v844 = vunpack.c.l.b16 %v292
  %v845 = vunpack.c.h.b16 %v292
  %v846 = vunpack.c.l.b16 %v293
  %v847 = vunpack.c.h.b16 %v293
  %v848 = vunpack.c.l.b16 %v294
  %v849 = vunpack.c.h.b16 %v294
  %v850 = vunpack.c.l.b16 %v295
  %v851 = vunpack.c.h.b16 %v295
  %v852 = vunpack.c.l.b16 %v296
  %v853 = vunpack.c.h.b16 %v296
  %v854 = vunpack.c.l.b16 %v297
  %v855 = vunpack.c.h.b16 %v297
  %v856 = vunpack.c.l.b16 %v298
  %v857 = vunpack.c.h.b16 %v298
  %v858 = vunpack.c.l.b16 %v299
  %v859 = vunpack.c.h.b16 %v299
  %v860 = vunpack.c.l.b16 %v300
  %v861 = vunpack.c.h.b16 %v300
  %v862 = vunpack.c.l.b16 %v301
  %v863 = vunpack.c.h.b16 %v301
  %v864 = vunpack.c.l.b16 %v302
  %v865 = vunpack.c.h.b16 %v302
  %v866 = vunpack.c.l.b16 %v303
  %v867 = vunpack.c.h.b16 %v303
  %v868 = vunpack.c.l.b16 %v304
  %v869 = vunpack.c.h.b16 %v304
  %v870 = vunpack.c.l.b16 %v305
  %v871 = vunpack.c.h.b16 %v305
  %v872 = vunpack.c.l.b16 %v306
  %v873 = vunpack.c.h.b16 %v306
  %v874 = vunpack.c.l.b16 %v307
  %v875 = vunpack.c.h.b16 %v307
  %v876 = vunpack.c.l.b16 %v308
  %v877 = vunpack.c.h.b16 %v308
  %v878 = vunpack.c.l.b16 %v309
  %v879 = vunpack.c.h.b16 %v309
  %v880 = vunpack.c.l.b16 %v310
  %v881 = vunpack.c.h.b16 %v310
  %v882 = vunpack.c.l.b16 %v311
  %v883 = vunpack.c.h.b16 %v311
  %v884 = vunpack.c.l.b16 %v312
  %v885 = vunpack.c.h.b16 %v312
  %v886 = vunpack.c.l.b16 %v313
  %v887 = vunpack.c.h.b16 %v313
  %v888 = vunpack.c.l.b16 %v314
  %v889 = vunpack.c.h.b16 %v314
  %v890 = vunpack.c.l.b16 %v315
  %v891 = vunpack.c.h.b16 %v315
  %v892 = vunpack.c.l.b16 %v316
  %v893 = vunpack.c.h.b16 %v316
  %v894 = vunpack.c.l.b16 %v317
  %v895 = vunpack.c.h.b16 %v317
  %v896 = vunpack.c.l.b16 %v318
  %v897 = vunpack.c.h.b16 %v318
  %v898 = vunpack.c.l.b16 %v319
  %v899 = vunpack.c.h.b16 %v319
  %v900 = vunpack.c.l.b16 %v320
  %v901 = vunpack.c.h.b16 %v320
  %v902 = vunpack.c.l.b16 %v321
  %v903 = vunpack.c.h.b16 %v321
  %v904 = vunpack.c.l.b16 %v322
  %v905 = vunpack.c.h.b16 %v322
  %v906 = vunpack.c.l.b16 %v323
  %v907 = vunpack.c.h.b16 %v323
  %v908 = vunpack.c.l.b16 %v324
  %v909 = vunpack.c.h.b16 %v324
  %v910 = vunpack.c.l.b16 %v325
  %v911 = vunpack.c.h.b16 %v325
  %v912 = vunpack.c.l.b16 %v326
  %v913 = vunpack.c.h.b16 %v326
  %v914 = vunpack.c.l.b16 %v327
  %v915 = vunpack.c.h.b16 %v327
  %v916 = vunpack.c.l.b16 %v328
  %v917 = vunpack.c.h.b16 %v328
  %v918 = vunpack.c.l.b16 %v329
  %v919 = vunpack.c.h.b16 %v329
  %v920 = vunpack.c.l.b16 %v330
  %v921 = vunpack.c.h.b16 %v330
  %v922 = vunpack.c.l.b16 %v331
  %v923 = vunpack.c.h.b16 %v331
  %v924 = vunpack.c.l.b16 %v332
  %v925 = vunpack.c.h.b16 %v332
  %v926 = vunpack.c.l.b16 %v333
  %v927 = vunpack.c.h.b16 %v333
  %v928 = vunpack.c.l.b16 %v334
  %v929 = vunpack.c.h.b16 %v334
  %v930 = vunpack.c.l.b16 %v335
  %v931 = vunpack.c.h.b16 %v335
  %v932 = vunpack.c.l.b16 %v336
  %v933 = vunpack.c.h.b16 %v336
  %v934 = vunpack.c.l.b16 %v337
  %v935 = vunpack.c.h.b16 %v337
  %v936 = vunpack.c.l.b16 %v338
  %v937 = vunpack.c.h.b16 %v338
  %v938 = vunpack.c.l.b16 %v339
  %v939 = vunpack.c.h.b16 %v339
  %v940 = vunpack.c.l.b16 %v340
  %v941 = vunpack.c.h.b16 %v340
  %v942 = vunpack.c.l.b16 %v341
  %v943 = vunpack.c.h.b16 %v341
  %v944 = vunpack.c.l.b16 %v342
  %v945 = vunpack.c.h.b16 %v342
  %v946 = vunpack.c.l.b16 %v343
  %v947 = vunpack.c.h.b16 %v343
  %v948 = vunpack.c.l.b16 %v344
  %v949 = vunpack.c.h.b16 %v344
  %v950 = vunpack.c.l.b16 %v345
  %v951 = vunpack.c.h.b16 %v345
  %v952 = vunpack.c.l.b16 %v346
  %v953 = vunpack.c.h.b16 %v346
  %v954 = vunpack.c.l.b16 %v347
  %v955 = vunpack.c.h.b16 %v347
  %v956 = vunpack.c.l.b16 %v348
  %v957 = vunpack.c.h.b16 %v348
  %v958 = vunpack.c.l.b16 %v349
  %v959 = vunpack.c.h.b16 %v349
  %v960 = vunpack.c.l.b16 %v350
  %v961 = vunpack.c.h.b16 %v350
  %v962 = vunpack.c.l.b16 %v351
  %v963 = vunpack.c.h.b16 %v351
  %v964 = vunpack.c.l.b16 %v352
  %v965 = vunpack.c.h.b16 %v352
  %v966 = vunpack.c.l.b16 %v353
  %v967 = vunpack.c.h.b16 %v353
  %v968 = vunpack.c.l.b16 %v354
  %v969 = vunpack.c.h.b16 %v354
  %v970 = vunpack.c.l.b16 %v355
  %v971 = vunpack.c.h.b16 %v355
  %v972 = vunpack.c.l.b16 %v356
  %v973 = vunpack.c.h.b16 %v356
  %v974 = vunpack.c.l.b16 %v357
  %v975 = vunpack.c.h.b16 %v357
  %v976 = vunpack.c.l.b16 %v358
  %v977 = vunpack.c.h.b16 %v358
  %v978 = vunpack.c.l.b16 %v359
  %v979 = vunpack.c.h.b16 %v359
  %v980 = vunpack.c.l.b16 %v360
  %v981 = vunpack.c.h.b16 %v360
  %v982 = vunpack.c.l.b16 %v361
  %v983 = vunpack.c.h.b16 %v361
  %v984 = vunpack.c.l.b16 %v362
  %v985 = vunpack.c.h.b16 %v362
  %v986 = vunpack.c.l.b16 %v363
  %v987 = vunpack.c.h.b16 %v363
  %v988 = vunpack.c.l.b16 %v364
  %v989 = vunpack.c.h.b16 %v364
  %v990 = vunpack.c.l.b16 %v365
  %v991 = vunpack.c.h.b16 %v365
  %v992 = vunpack.c.l.b16 %v366
  %v993 = vunpack.c.h.b16 %v366
  %v994 = vunpack.c.l.b16 %v367
  %v995 = vunpack.c.h.b16 %v367
  %v996 = vunpack.c.l.b16 %v368
  %v997 = vunpack.c.h.b16 %v368
  %v998 = vunpack.c.l.b16 %v369
  %v999 = vunpack.c.h.b16 %v369
  %v1000 = vunpack.c.l.b16 %v370
  %v1001 = vunpack.c.h.b16 %v370
  %v1002 = vunpack.c.l.b16 %v371
  %v1003 = vunpack.c.h.b16 %v371
  %v1004 = vunpack.c.l.b16 %v372
  %v1005 = vunpack.c.h.b16 %v372
  %v1006 = vunpack.c.l.b16 %v373
  %v1007 = vunpack.c.h.b16 %v373
  %v1008 = vunpack.c.l.b16 %v374
  %v1009 = vunpack.c.h.b16 %v374
  %v1010 = vunpack.c.l.b16 %v375
  %v1011 = vunpack.c.h.b16 %v375
  %v1012 = vunpack.c.l.b16 %v376
  %v1013 = vunpack.c.h.b16 %v376
  %v1014 = vunpack.c.l.b16 %v377
  %v1015 = vunpack.c.h.b16 %v377
  %v1016 = vunpack.c.l.b16 %v378
  %v1017 = vunpack.c.h.b16 %v378
  %v1018 = vunpack.c.l.b16 %v379
  %v1019 = vunpack.c.h.b16 %v379
  %v1020 = vunpack.c.l.b16 %v380
  %v1021 = vunpack.c.h.b16 %v380
  %v1022 = vunpack.c.l.b16 %v381
  %v1023 = vunpack.c.h.b16 %v381
  %v1024 = vunpack.c.l.b16 %v382
  %v1025 = vunpack.c.h.b16 %v382
  %v1026 = vunpack.c.l.b16 %v383
  %v1027 = vunpack.c.h.b16 %v383
  %v1028 = vunpack.c.l.b16 %v384
  %v1029 = vunpack.c.h.b16 %v384
  %v1030 = vunpack.c.l.b16 %v385
  %v1031 = vunpack.c.h.b16 %v385
  %v1032 = vunpack.c.l.b16 %v386
  %v1033 = vunpack.c.h.b16 %v386
  %v1034 = vunpack.c.l.b16 %v387
  %v1035 = vunpack.c.h.b16 %v387
  %v1036 = vunpack.c.l.b16 %v388
  %v1037 = vunpack.c.h.b16 %v388
  %v1038 = vunpack.c.l.b16 %v389
  %v1039 = vunpack.c.h.b16 %v389
  %v1040 = vunpack.c.l.b16 %v390
  %v1041 = vunpack.c.h.b16 %v390
  %v1042 = vunpack.c.l.b16 %v391
  %v1043 = vunpack.c.h.b16 %v391
  %v1044 = vunpack.c.l.b16 %v392
  %v1045 = vunpack.c.h.b16 %v392
  %v1046 = vunpack.c.l.b16 %v393
  %v1047 = vunpack.c.h.b16 %v393
  %v1048 = vunpack.c.l.b16 %v394
  %v1049 = vunpack.c.h.b16 %v394
  %v1050 = vunpack.c.l.b16 %v395
  %v1051 = vunpack.c.h.b16 %v395
  %v1052 = vunpack.c.l.b16 %v396
  %v1053 = vunpack.c.h.b16 %v396
  %v1054 = vunpack.c.l.b16 %v397
  %v1055 = vunpack.c.h.b16 %v397
  %v1056 = vunpack.c.l.b16 %v398
  %v1057 = vunpack.c.h.b16 %v398
  %v1058 = vunpack.c.l.b16 %v399
  %v1059 = vunpack.c.h.b16 %v399
  %v1060 = vunpack.c.l.b16 %v400
  %v1061 = vunpack.c.h.b16 %v400
  %v1062 = vunpack.c.l.b16 %v401
  %v1063 = vunpack.c.h.b16 %v401
  %v1064 = vunpack.c.l.b16 %v402
  %v1065 = vunpack.c.h.b16 %v402
  %v1066 = vunpack.c.l.b16 %v403
  %v1067 = vunpack.c.h.b16 %v403
  %v1068 = vunpack.c.l.b16 %v404
  %v1069 = vunpack.c.h.b16 %v404
  %v1070 = vunpack.c.l.b16 %v405
  %v1071 = vunpack.c.h.b16 %v405
  %v1072 = vunpack.c.l.b16 %v406
  %v1073 = vunpack.c.h.b16 %v406
  %v1074 = vunpack.c.l.b16 %v407
  %v1075 = vunpack.c.h.b16 %v407
  %v1076 = vunpack.c.l.b16 %v408
  %v1077 = vunpack.c.h.b16 %v408
  %v1078 = vunpack.c.l.b16 %v409
  %v1079 = vunpack.c.h.b16 %v409
  %v1080 = vunpack.c.l.b16 %v410
  %v1081 = vunpack.c.h.b16 %v410
  %v1082 = vunpack.c.l.b16 %v411
  %v1083 = vunpack.c.h.b16 %v411
  %v1084 = vunpack.c.l.b16 %v412
  %v1085 = vunpack.c.h.b16 %v412
  %v1086 = vunpack.c.l.b16 %v413
  %v1087 = vunpack.c.h.b16 %v413
  %v1088 = vunpack.c.l.b16 %v414
  %v1089 = vunpack.c.h.b16 %v414
  %v1090 = vunpack.c.l.b16 %v415
  %v1091 = vunpack.c.h.b16 %v415
  %v1092 = vunpack.c.l.b16 %v416
  %v1093 = vunpack.c.h.b16 %v416
  %v1094 = vunpack.c.l.b16 %v417
  %v1095 = vunpack.c.h.b16 %v417
  %v1096 = vunpack.c.l.b16 %v418
  %v1097 = vunpack.c.h.b16 %v418
  %v1098 = vunpack.c.l.b16 %v419
  %v1099 = vunpack.c.h.b16 %v419
  %v1100 = vunpack.c.l.b16 %v420
  %v1101 = vunpack.c.h.b16 %v420
  %v1102 = vunpack.c.l.b16 %v421
  %v1103 = vunpack.c.h.b16 %v421
  %v1104 = vunpack.c.l.b16 %v422
  %v1105 = vunpack.c.h.b16 %v422
  %v1106 = vunpack.c.l.b16 %v423
  %v1107 = vunpack.c.h.b16 %v423
  %v1108 = vunpack.c.l.b16 %v424
  %v1109 = vunpack.c.h.b16 %v424
  %v1110 = vunpack.c.l.b16 %v425
  %v1111 = vunpack.c.h.b16 %v425
  %v1112 = vunpack.c.l.b16 %v426
  %v1113 = vunpack.c.h.b16 %v426
  %v1114 = vunpack.c.l.b16 %v427
  %v1115 = vunpack.c.h.b16 %v427
  %v1116 = vunpack.c.l.b16 %v428
  %v1117 = vunpack.c.h.b16 %v428
  %v1118 = vunpack.c.l.b16 %v429
  %v1119 = vunpack.c.h.b16 %v429
  %v1120 = vunpack.c.l.b16 %v430
  %v1121 = vunpack.c.h.b16 %v430
  %v1122 = vunpack.c.l.b16 %v431
  %v1123 = vunpack.c.h.b16 %v431
  %v1124 = vunpack.c.l.b16 %v432
  %v1125 = vunpack.c.h.b16 %v432
  %v1126 = vunpack.c.l.b16 %v433
  %v1127 = vunpack.c.h.b16 %v433
  %v1128 = vunpack.c.l.b16 %v434
  %v1129 = vunpack.c.h.b16 %v434
  %v1130 = vunpack.c.l.b16 %v435
  %v1131 = vunpack.c.h.b16 %v435
  %v1132 = vunpack.c.l.b16 %v436
  %v1133 = vunpack.c.h.b16 %v436
  %v1134 = vunpack.c.l.b16 %v437
  %v1135 = vunpack.c.h.b16 %v437
  %v1136 = vunpack.c.l.b16 %v438
  %v1137 = vunpack.c.h.b16 %v438
  %v1138 = vunpack.c.l.b16 %v439
  %v1139 = vunpack.c.h.b16 %v439
  %v1140 = vunpack.c.l.b16 %v440
  %v1141 = vunpack.c.h.b16 %v440
  %v1142 = vunpack.c.l.b16 %v441
  %v1143 = vunpack.c.h.b16 %v441
  %v1144 = vunpack.c.l.b16 %v442
  %v1145 = vunpack.c.h.b16 %v442
  %v1146 = vunpack.c.l.b16 %v443
  %v1147 = vunpack.c.h.b16 %v443
  %v1148 = vunpack.c.l.b16 %v444
  %v1149 = vunpack.c.h.b16 %v444
  %v1150 = vunpack.c.l.b16 %v445
  %v1151 = vunpack.c.h.b16 %v445
  %v1152 = vunpack.c.l.b16 %v446
  %v1153 = vunpack.c.h.b16 %v446
  %v1154 = vunpack.c.l.b16 %v447
  %v1155 = vunpack.c.h.b16 %v447
  %v1156 = vunpack.c.l.b16 %v448
  %v1157 = vunpack.c.h.b16 %v448
  %v1158 = vunpack.c.l.b16 %v449
  %v1159 = vunpack.c.h.b16 %v449
  %v1160 = vunpack.c.l.b16 %v450
  %v1161 = vunpack.c.h.b16 %v450
  %v1162 = vunpack.c.l.b16 %v451
  %v1163 = vunpack.c.h.b16 %v451
  %v1164 = vunpack.c.l.b16 %v452
  %v1165 = vunpack.c.h.b16 %v452
  %v1166 = vunpack.c.l.b16 %v453
  %v1167 = vunpack.c.h.b16 %v453
  %v1168 = vunpack.c.l.b16 %v454
  %v1169 = vunpack.c.h.b16 %v454
  %v1170 = vunpack.c.l.b16 %v455
  %v1171 = vunpack.c.h.b16 %v455
  %v1172 = vunpack.c.l.b16 %v456
  %v1173 = vunpack.c.h.b16 %v456
  %v1174 = vunpack.c.l.b16 %v457
  %v1175 = vunpack.c.h.b16 %v457
  %v1176 = vunpack.c.l.b16 %v458
  %v1177 = vunpack.c.h.b16 %v458
  %v1178 = vunpack.c.l.b16 %v459
  %v1179 = vunpack.c.h.b16 %v459
  %v1180 = vunpack.c.l.b16 %v460
  %v1181 = vunpack.c.h.b16 %v460
  %v1182 = vunpack.c.l.b16 %v461
  %v1183 = vunpack.c.h.b16 %v461
  %v1184 = vunpack.c.l.b16 %v462
  %v1185 = vunpack.c.h.b16 %v462
  %v1186 = vunpack.c.l.b16 %v463
  %v1187 = vunpack.c.h.b16 %v463
  %v1188 = vunpack.c.l.b16 %v464
  %v1189 = vunpack.c.h.b16 %v464
  %v1190 = vunpack.c.l.b16 %v465
  %v1191 = vunpack.c.h.b16 %v465
  %v1192 = vunpack.c.l.b16 %v466
  %v1193 = vunpack.c.h.b16 %v466
  %v1194 = vunpack.c.l.b16 %v467
  %v1195 = vunpack.c.h.b16 %v467
  %v1196 = vunpack.c.l.b16 %v468
  %v1197 = vunpack.c.h.b16 %v468
  %v1198 = vunpack.c.l.b16 %v469
  %v1199 = vunpack.c.h.b16 %v469
  %v1200 = vunpack.c.l.b16 %v470
  %v1201 = vunpack.c.h.b16 %v470
  %v1202 = vunpack.c.l.b16 %v471
  %v1203 = vunpack.c.h.b16 %v471
  %v1204 = vunpack.c.l.b16 %v472
  %v1205 = vunpack.c.h.b16 %v472
  %v1206 = vunpack.c.l.b16 %v473
  %v1207 = vunpack.c.h.b16 %v473
  %v1208 = vunpack.c.l.b16 %v474
  %v1209 = vunpack.c.h.b16 %v474
  %v1210 = vunpack.c.l.b16 %v475
  %v1211 = vunpack.c.h.b16 %v475
  %v1212 = vunpack.c.l.b16 %v476
  %v1213 = vunpack.c.h.b16 %v476
  %v1214 = vunpack.c.l.b16 %v477
  %v1215 = vunpack.c.h.b16 %v477
  %v1216 = vunpack.c.l.b16 %v478
  %v1217 = vunpack.c.h.b16 %v478
  %v1218 = vunpack.c.l.b16 %v479
  %v1219 = vunpack.c.h.b16 %v479
  %v1220 = vunpack.c.l.b16 %v480
  %v1221 = vunpack.c.h.b16 %v480
  %v1222 = vunpack.c.l.b16 %v481
  %v1223 = vunpack.c.h.b16 %v481
  %v1224 = vunpack.c.l.b16 %v482
  %v1225 = vunpack.c.h.b16 %v482
  %v1226 = vunpack.c.l.b16 %v483
  %v1227 = vunpack.c.h.b16 %v483
  %v1228 = vunpack.c.l.b16 %v484
  %v1229 = vunpack.c.h.b16 %v484
  %v1230 = vunpack.c.l.b16 %v485
  %v1231 = vunpack.c.h.b16 %v485
  %v1232 = vunpack.c.l.b16 %v486
  %v1233 = vunpack.c.h.b16 %v486
  %v1234 = vunpack.c.l.b16 %v487
  %v1235 = vunpack.c.h.b16 %v487
  %v1236 = vunpack.c.l.b16 %v488
  %v1237 = vunpack.c.h.b16 %v488
  %v1238 = vunpack.c.l.b16 %v489
  %v1239 = vunpack.c.h.b16 %v489
  %v1240 = vunpack.c.l.b16 %v490
  %v1241 = vunpack.c.h.b16 %v490
  %v1242 = vunpack.c.l.b16 %v491
  %v1243 = vunpack.c.h.b16 %v491
  %v1244 = vunpack.c.l.b16 %v492
  %v1245 = vunpack.c.h.b16 %v492
  %v1246 = vunpack.c.l.b16 %v493
  %v1247 = vunpack.c.h.b16 %v493
  %v1248 = vunpack.c.l.b16 %v494
  %v1249 = vunpack.c.h.b16 %v494
  %v1250 = vunpack.c.l.b16 %v495
  %v1251 = vunpack.c.h.b16 %v495
  %v1252 = vunpack.c.l.b16 %v496
  %v1253 = vunpack.c.h.b16 %v496
  %v1254 = vunpack.c.l.b16 %v497
  %v1255 = vunpack.c.h.b16 %v497
  %v1256 = vunpack.c.l.b16 %v498
  %v1257 = vunpack.c.h.b16 %v498
  %v1258 = vunpack.c.l.b16 %v499
  %v1259 = vunpack.c.h.b16 %v499
  %v1260 = vunpack.c.l.b16 %v500
  %v1261 = vunpack.c.h.b16 %v500
  %v1262 = vunpack.c.l.b16 %v501
  %v1263 = vunpack.c.h.b16 %v501
  %v1264 = vunpack.c.l.b16 %v502
  %v1265 = vunpack.c.h.b16 %v502
  %v1266 = vunpack.c.l.b16 %v503
  %v1267 = vunpack.c.h.b16 %v503
  %v1268 = vunpack.c.l.b16 %v504
  %v1269 = vunpack.c.h.b16 %v504
  %v1270 = vunpack.c.l.b16 %v505
  %v1271 = vunpack.c.h.b16 %v505
  %v1272 = vunpack.c.l.b16 %v506
  %v1273 = vunpack.c.h.b16 %v506
  %v1274 = vunpack.c.l.b16 %v507
  %v1275 = vunpack.c.h.b16 %v507
  %v1276 = vpack.c.b16 %v766, %v764
  %v1277 = vpack.c.b16 %v767, %v765
  %v1278 = vpack.c.b16 %v770, %v768
  %v1279 = vpack.c.b16 %v771, %v769
  %v1280 = vpack.c.b16 %v774, %v772
  %v1281 = vpack.c.b16 %v775, %v773
  %v1282 = vpack.c.b16 %v778, %v776
  %v1283 = vpack.c.b16 %v779, %v777
  %v1284 = vpack.c.b16 %v782, %v780
  %v1285 = vpack.c.b16 %v783, %v781
  %v1286 = vpack.c.b16 %v786, %v784
  %v1287 = vpack.c.b16 %v787, %v785
  %v1288 = vpack.c.b16 %v790, %v788
  %v1289 = vpack.c.b16 %v791, %v789
  %v1290 = vpack.c.b16 %v794, %v792
  %v1291 = vpack.c.b16 %v795, %v793
  %v1292 = vpack.c.b16 %v798, %v796
  %v1293 = vpack.c.b16 %v799, %v797
  %v1294 = vpack.c.b16 %v802, %v800
  %v1295 = vpack.c.b16 %v803, %v801
  %v1296 = vpack.c.b16 %v806, %v804
  %v1297 = vpack.c.b16 %v807, %v805
  %v1298 = vpack.c.b16 %v810, %v808
  %v1299 = vpack.c.b16 %v811, %v809
  %v1300 = vpack.c.b16 %v814, %v812
  %v1301 = vpack.c.b16 %v815, %v813
  %v1302 = vpack.c.b16 %v818, %v816
  %v1303 = vpack.c.b16 %v819, %v817
  %v1304 = vpack.c.b16 %v822, %v820
  %v1305 = vpack.c.b16 %v823, %v821
  %v1306 = vpack.c.b16 %v826, %v824
  %v1307 = vpack.c.b16 %v827, %v825
  %v1308 = vpack.c.b16 %v830, %v828
  %v1309 = vpack.c.b16 %v831, %v829
  %v1310 = vpack.c.b16 %v834, %v832
  %v1311 = vpack.c.b16 %v835, %v833
  %v1312 = vpack.c.b16 %v838, %v836
  %v1313 = vpack.c.b16 %v839, %v837
  %v1314 = vpack.c.b16 %v842, %v840
  %v1315 = vpack.c.b16 %v843, %v841
  %v1316 = vpack.c.b16 %v846, %v844
  %v1317 = vpack.c.b16 %v847, %v845
  %v1318 = vpack.c.b16 %v850, %v848
  %v1319 = vpack.c.b16 %v851, %v849
  %v1320 = vpack.c.b16 %v854, %v852
  %v1321 = vpack.c.b16 %v855, %v853
  %v1322 = vpack.c.b16 %v858, %v856
  %v1323 = vpack.c.b16 %v859, %v857
  %v1324 = vpack.c.b16 %v862, %v860
  %v1325 = vpack.c.b16 %v863, %v861
  %v1326 = vpack.c.b16 %v866, %v864
  %v1327 = vpack.c.b16 %v867, %v865
  %v1328 = vpack.c.b16 %v870, %v868
  %v1329 = vpack.c.b16 %v871, %v869
  %v1330 = vpack.c.b16 %v874, %v872
  %v1331 = vpack.c.b16 %v875, %v873
  %v1332 = vpack.c.b16 %v878, %v876
  %v1333 = vpack.c.b16 %v879, %v877
  %v1334 = vpack.c.b16 %v882, %v880
  %v1335 = vpack.c.b16 %v883, %v881
  %v1336 = vpack.c.b16 %v886, %v884
  %v1337 = vpack.c.b16 %v887, %v885
  %v1338 = vpack.c.b16 %v890, %v888
  %v1339 = vpack.c.b16 %v891, %v889
  %v1340 = vpack.c.b16 %v894, %v892
  %v1341 = vpack.c.b16 %v895, %v893
  %v1342 = vpack.c.b16 %v898, %v896
  %v1343 = vpack.c.b16 %v899, %v897
  %v1344 = vpack.c.b16 %v902, %v900
  %v1345 = vpack.c.b16 %v903, %v901
  %v1346 = vpack.c.b16 %v906, %v904
  %v1347 = vpack.c.b16 %v907, %v905
  %v1348 = vpack.c.b16 %v910, %v908
  %v1349 = vpack.c.b16 %v911, %v909
  %v1350 = vpack.c.b16 %v914, %v912
  %v1351 = vpack.c.b16 %v915, %v913
  %v1352 = vpack.c.b16 %v918, %v916
  %v1353 = vpack.c.b16 %v919, %v917
  %v1354 = vpack.c.b16 %v922, %v920
  %v1355 = vpack.c.b16 %v923, %v921
  %v1356 = vpack.c.b16 %v926, %v924
  %v1357 = vpack.c.b16 %v927, %v925
  %v1358 = vpack.c.b16 %v930, %v928
  %v1359 = vpack.c.b16 %v931, %v929
  %v1360 = vpack.c.b16 %v934, %v932
  %v1361 = vpack.c.b16 %v935, %v933
  %v1362 = vpack.c.b16 %v938, %v936
  %v1363 = vpack.c.b16 %v939, %v937
  %v1364 = vpack.c.b16 %v942, %v940
  %v1365 = vpack.c.b16 %v943, %v941
  %v1366 = vpack.c.b16 %v946, %v944
  %v1367 = vpack.c.b16 %v947, %v945
  %v1368 = vpack.c.b16 %v950, %v948
  %v1369 = vpack.c.b16 %v951, %v949
  %v1370 = vpack.c.b16 %v954, %v952
  %v1371 = vpack.c.b16 %v955, %v953
  %v1372 = vpack.c.b16 %v958, %v956
  %v1373 = vpack.c.b16 %v959, %v957
  %v1374 = vpack.c.b16 %v962, %v960
  %v1375 = vpack.c.b16 %v963, %v961
  %v1376 = vpack.c.b16 %v966, %v964
  %v1377 = vpack.c.b16 %v967, %v965
  %v1378 = vpack.c.b16 %v970, %v968
  %v1379 = vpack.c.b16 %v971, %v969
  %v1380 = vpack.c.b16 %v974, %v972
  %v1381 = vpack.c.b16 %v975, %v973
  %v1382 = vpack.c.b16 %v978, %v976
  %v1383 = vpack.c.b16 %v979, %v977
  %v1384 = vpack.c.b16 %v982, %v980
  %v1385 = vpack.c.b16 %v983, %v981
  %v1386 = vpack.c.b16 %v986, %v984
  %v1387 = vpack.c.b16 %v987, %v985
  %v1388 = vpack.c.b16 %v990, %v988
  %v1389 = vpack.c.b16 %v991, %v989
  %v1390 = vpack.c.b16 %v994, %v992
  %v1391 = vpack.c.b16 %v995, %v993
  %v1392 = vpack.c.b16 %v998, %v996
  %v1393 = vpack.c.b16 %v999, %v997
  %v1394 = vpack.c.b16 %v1002, %v1000
  %v1395 = vpack.c.b16 %v1003, %v1001
  %v1396 = vpack.c.b16 %v1006, %v1004
  %v1397 = vpack.c.b16 %v1007, %v1005
  %v1398 = vpack.c.b16 %v1010, %v1008
  %v1399 = vpack.c.b16 %v1011, %v1009
  %v1400 = vpack.c.b16 %v1014, %v1012
  %v1401 = vpack.c.b16 %v1015, %v1013
  %v1402 = vpack.c.b16 %v1018, %v1016
  %v1403 = vpack.c.b16 %v1019, %v1017
  %v1404 = vpack.c.b16 %v1022, %v1020
  %v1405 = vpack.c.b16 %v1023, %v1021
  %v1406 = vpack.c.b16 %v1026, %v1024
  %v1407 = vpack.c.b16 %v1027, %v1025
  %v1408 = vpack.c.b16 %v1030, %v1028
  %v1409 = vpack.c.b16 %v1031, %v1029
  %v1410 = vpack.c.b16 %v1034, %v1032
  %v1411 = vpack.c.b16 %v1035, %v1033
  %v1412 = vpack.c.b16 %v1038, %v1036
  %v1413 = vpack.c.b16 %v1039, %v1037
  %v1414 = vpack.c.b16 %v1042, %v1040
  %v1415 = vpack.c.b16 %v1043, %v1041
  %v1416 = vpack.c.b16 %v1046, %v1044
  %v1417 = vpack.c.b16 %v1047, %v1045
  %v1418 = vpack.c.b16 %v1050, %v1048
  %v1419 = vpack.c.b16 %v1051, %v1049
  %v1420 = vpack.c.b16 %v1054, %v1052
  %v1421 = vpack.c.b16 %v1055, %v1053
  %v1422 = vpack.c.b16 %v1058, %v1056
  %v1423 = vpack.c.b16 %v1059, %v1057
  %v1424 = vpack.c.b16 %v1062, %v1060
  %v1425 = vpack.c.b16 %v1063, %v1061
  %v1426 = vpack.c.b16 %v1066, %v1064
  %v1427 = vpack.c.b16 %v1067, %v1065
  %v1428 = vpack.c.b16 %v1070, %v1068
  %v1429 = vpack.c.b16 %v1071, %v1069
  %v1430 = vpack.c.b16 %v1074, %v1072
  %v1431 = vpack.c.b16 %v1075, %v1073
  %v1432 = vpack.c.b16 %v1078, %v1076
  %v1433 = vpack.c.b16 %v1079, %v1077
  %v1434 = vpack.c.b16 %v1082, %v1080
  %v1435 = vpack.c.b16 %v1083, %v1081
  %v1436 = vpack.c.b16 %v1086, %v1084
  %v1437 = vpack.c.b16 %v1087, %v1085
  %v1438 = vpack.c.b16 %v1090, %v1088
  %v1439 = vpack.c.b16 %v1091, %v1089
  %v1440 = vpack.c.b16 %v1094, %v1092
  %v1441 = vpack.c.b16 %v1095, %v1093
  %v1442 = vpack.c.b16 %v1098, %v1096
  %v1443 = vpack.c.b16 %v1099, %v1097
  %v1444 = vpack.c.b16 %v1102, %v1100
  %v1445 = vpack.c.b16 %v1103, %v1101
  %v1446 = vpack.c.b16 %v1106, %v1104
  %v1447 = vpack.c.b16 %v1107, %v1105
  %v1448 = vpack.c.b16 %v1110, %v1108
  %v1449 = vpack.c.b16 %v1111, %v1109
  %v1450 = vpack.c.b16 %v1114, %v1112
  %v1451 = vpack.c.b16 %v1115, %v1113
  %v1452 = vpack.c.b16 %v1118, %v1116
  %v1453 = vpack.c.b16 %v1119, %v1117
  %v1454 = vpack.c.b16 %v1122, %v1120
  %v1455 = vpack.c.b16 %v1123, %v1121
  %v1456 = vpack.c.b16 %v1126, %v1124
  %v1457 = vpack.c.b16 %v1127, %v1125
  %v1458 = vpack.c.b16 %v1130, %v1128
  %v1459 = vpack.c.b16 %v1131, %v1129
  %v1460 = vpack.c.b16 %v1134, %v1132
  %v1461 = vpack.c.b16 %v1135, %v1133
  %v1462 = vpack.c.b16 %v1138, %v1136
  %v1463 = vpack.c.b16 %v1139, %v1137
  %v1464 = vpack.c.b16 %v1142, %v1140
  %v1465 = vpack.c.b16 %v1143, %v1141
  %v1466 = vpack.c.b16 %v1146, %v1144
  %v1467 = vpack.c.b16 %v1147, %v1145
  %v1468 = vpack.c.b16 %v1150, %v1148
  %v1469 = vpack.c.b16 %v1151, %v1149
  %v1470 = vpack.c.b16 %v1154, %v1152
  %v1471 = vpack.c.b16 %v1155, %v1153
  %v1472 = vpack.c.b16 %v1158, %v1156
  %v1473 = vpack.c.b16 %v1159, %v1157
  %v1474 = vpack.c.b16 %v1162, %v1160
  %v1475 = vpack.c.b16 %v1163, %v1161
  %v1476 = vpack.c.b16 %v1166, %v1164
  %v1477 = vpack.c.b16 %v1167, %v1165
  %v1478 = vpack.c.b16 %v1170, %v1168
  %v1479 = vpack.c.b16 %v1171, %v1169
  %v1480 = vpack.c.b16 %v1174, %v1172
  %v1481 = vpack.c.b16 %v1175, %v1173
  %v1482 = vpack.c.b16 %v1178, %v1176
  %v1483 = vpack.c.b16 %v1179, %v1177
  %v1484 = vpack.c.b16 %v1182, %v1180
  %v1485 = vpack.c.b16 %v1183, %v1181
  %v1486 = vpack.c.b16 %v1186, %v1184
  %v1487 = vpack.c.b16 %v1187, %v1185
  %v1488 = vpack.c.b16 %v1190, %v1188
  %v1489 = vpack.c.b16 %v1191, %v1189
  %v1490 = vpack.c.b16 %v1194, %v1192
  %v1491 = vpack.c.b16 %v1195, %v1193
  %v1492 = vpack.c.b16 %v1198, %v1196
  %v1493 = vpack.c.b16 %v1199, %v1197
  %v1494 = vpack.c.b16 %v1202, %v1200
  %v1495 = vpack.c.b16 %v1203, %v1201
  %v1496 = vpack.c.b16 %v1206, %v1204
  %v1497 = vpack.c.b16 %v1207, %v1205
  %v1498 = vpack.c.b16 %v1210, %v1208
  %v1499 = vpack.c.b16 %v1211, %v1209
  %v1500 = vpack.c.b16 %v1214, %v1212
  %v1501 = vpack.c.b16 %v1215, %v1213
  %v1502 = vpack.c.b16 %v1218, %v1216
  %v1503 = vpack.c.b16 %v1219, %v1217
  %v1504 = vpack.c.b16 %v1222, %v1220
  %v1505 = vpack.c.b16 %v1223, %v1221
  %v1506 = vpack.c.b16 %v1226, %v1224
  %v1507 = vpack.c.b16 %v1227, %v1225
  %v1508 = vpack.c.b16 %v1230, %v1228
  %v1509 = vpack.c.b16 %v1231, %v1229
  %v1510 = vpack.c.b16 %v1234, %v1232
  %v1511 = vpack.c.b16 %v1235, %v1233
  %v1512 = vpack.c.b16 %v1238, %v1236
  %v1513 = vpack.c.b16 %v1239, %v1237
  %v1514 = vpack.c.b16 %v1242, %v1240
  %v1515 = vpack.c.b16 %v1243, %v1241
  %v1516 = vpack.c.b16 %v1246, %v1244
  %v1517 = vpack.c.b16 %v1247, %v1245
  %v1518 = vpack.c.b16 %v1250, %v1248
  %v1519 = vpack.c.b16 %v1251, %v1249
  %v1520 = vpack.c.b16 %v1254, %v1252
  %v1521 = vpack.c.b16 %v1255, %v1253
  %v1522 = vpack.c.b16 %v1258, %v1256
  %v1523 = vpack.c.b16 %v1259, %v1257
  %v1524 = vpack.c.b16 %v1262, %v1260
  %v1525 = vpack.c.b16 %v1263, %v1261
  %v1526 = vpack.c.b16 %v1266, %v1264
  %v1527 = vpack.c.b16 %v1267, %v1265
  %v1528 = vpack.c.b16 %v1270, %v1268
  %v1529 = vpack.c.b16 %v1271, %v1269
  %v1530 = vpack.c.b16 %v1274, %v1272
  %v1531 = vpack.c.b16 %v1275, %v1273
  %1788 = vmatpush.bf16.msra.mxu0 %v1290
  %1789 = vmatpush.bf16.msra.mxu0 %v1288
  %1790 = vmatpush.bf16.msra.mxu0 %v1286
  %1791 = vmatpush.bf16.msra.mxu0 %v1284
  %1792 = vmatpush.bf16.msra.mxu0 %v1282
  %1793 = vmatpush.bf16.msra.mxu0 %v1280
  %1794 = vmatpush.bf16.msra.mxu0 %v1278
  %1795 = vmatpush.bf16.msra.mxu0 %v1276
  %1796 = vmatmul.bf16.gmra.mxu0 %v236
  %v1797 = vpop.f32.mrf.mxu0
  %v1798 = vadd.f32 0.0, %v1797
  %v1799 = vpop.f32.mrf.mxu0
  %1800 = vdwg.mxu0
  %1801 = vmatpush.bf16.msra.mxu0 %v1306
  %1802 = vmatpush.bf16.msra.mxu0 %v1304
  %1803 = vmatpush.bf16.msra.mxu0 %v1302
  %1804 = vmatpush.bf16.msra.mxu0 %v1300
  %1805 = vmatpush.bf16.msra.mxu0 %v1298
  %1806 = vmatpush.bf16.msra.mxu0 %v1296
  %1807 = vmatpush.bf16.msra.mxu0 %v1294
  %1808 = vmatpush.bf16.msra.mxu0 %v1292
  %1809 = vmatmul.bf16.gmra.mxu0 %v237
  %v1810 = vpop.f32.mrf.mxu0
  %v1811 = vadd.f32 %v1798, %v1810
  %v1812 = vpop.f32.mrf.mxu0
  %1813 = vdwg.mxu0
  %1814 = vmatpush.bf16.msra.mxu0 %v1322
  %1815 = vmatpush.bf16.msra.mxu0 %v1320
  %1816 = vmatpush.bf16.msra.mxu0 %v1318
  %1817 = vmatpush.bf16.msra.mxu0 %v1316
  %1818 = vmatpush.bf16.msra.mxu0 %v1314
  %1819 = vmatpush.bf16.msra.mxu0 %v1312
  %1820 = vmatpush.bf16.msra.mxu0 %v1310
  %1821 = vmatpush.bf16.msra.mxu0 %v1308
  %1822 = vmatmul.bf16.gmra.mxu0 %v238
  %v1823 = vpop.f32.mrf.mxu0
  %v1824 = vadd.f32 %v1811, %v1823
  %v1825 = vpop.f32.mrf.mxu0
  %1826 = vdwg.mxu0
  %1827 = vmatpush.bf16.msra.mxu0 %v1338
  %1828 = vmatpush.bf16.msra.mxu0 %v1336
  %1829 = vmatpush.bf16.msra.mxu0 %v1334
  %1830 = vmatpush.bf16.msra.mxu0 %v1332
  %1831 = vmatpush.bf16.msra.mxu0 %v1330
  %1832 = vmatpush.bf16.msra.mxu0 %v1328
  %1833 = vmatpush.bf16.msra.mxu0 %v1326
  %1834 = vmatpush.bf16.msra.mxu0 %v1324
  %1835 = vmatmul.bf16.gmra.mxu0 %v239
  %v1836 = vpop.f32.mrf.mxu0
  %v1837 = vadd.f32 %v1824, %v1836
  %v1838 = vpop.f32.mrf.mxu0
  %1839 = vdwg.mxu0
  %1840 = vmatpush.bf16.msra.mxu0 %v1354
  %1841 = vmatpush.bf16.msra.mxu0 %v1352
  %1842 = vmatpush.bf16.msra.mxu0 %v1350
  %1843 = vmatpush.bf16.msra.mxu0 %v1348
  %1844 = vmatpush.bf16.msra.mxu0 %v1346
  %1845 = vmatpush.bf16.msra.mxu0 %v1344
  %1846 = vmatpush.bf16.msra.mxu0 %v1342
  %1847 = vmatpush.bf16.msra.mxu0 %v1340
  %1848 = vmatmul.bf16.gmra.mxu0 %v240
  %v1849 = vpop.f32.mrf.mxu0
  %v1850 = vadd.f32 %v1837, %v1849
  %v1851 = vpop.f32.mrf.mxu0
  %1852 = vdwg.mxu0
  %1853 = vmatpush.bf16.msra.mxu0 %v1370
  %1854 = vmatpush.bf16.msra.mxu0 %v1368
  %1855 = vmatpush.bf16.msra.mxu0 %v1366
  %1856 = vmatpush.bf16.msra.mxu0 %v1364
  %1857 = vmatpush.bf16.msra.mxu0 %v1362
  %1858 = vmatpush.bf16.msra.mxu0 %v1360
  %1859 = vmatpush.bf16.msra.mxu0 %v1358
  %1860 = vmatpush.bf16.msra.mxu0 %v1356
  %1861 = vmatmul.bf16.gmra.mxu0 %v241
  %v1862 = vpop.f32.mrf.mxu0
  %v1863 = vadd.f32 %v1850, %v1862
  %v1864 = vpop.f32.mrf.mxu0
  %1865 = vdwg.mxu0
  %1866 = vmatpush.bf16.msra.mxu0 %v1386
  %1867 = vmatpush.bf16.msra.mxu0 %v1384
  %1868 = vmatpush.bf16.msra.mxu0 %v1382
  %1869 = vmatpush.bf16.msra.mxu0 %v1380
  %1870 = vmatpush.bf16.msra.mxu0 %v1378
  %1871 = vmatpush.bf16.msra.mxu0 %v1376
  %1872 = vmatpush.bf16.msra.mxu0 %v1374
  %1873 = vmatpush.bf16.msra.mxu0 %v1372
  %1874 = vmatmul.bf16.gmra.mxu0 %v242
  %v1875 = vpop.f32.mrf.mxu0
  %v1876 = vadd.f32 %v1863, %v1875
  %v1877 = vpop.f32.mrf.mxu0
  %1878 = vdwg.mxu0
  %1879 = vmatpush.bf16.msra.mxu0 %v1402
  %1880 = vmatpush.bf16.msra.mxu0 %v1400
  %1881 = vmatpush.bf16.msra.mxu0 %v1398
  %1882 = vmatpush.bf16.msra.mxu0 %v1396
  %1883 = vmatpush.bf16.msra.mxu0 %v1394
  %1884 = vmatpush.bf16.msra.mxu0 %v1392
  %1885 = vmatpush.bf16.msra.mxu0 %v1390
  %1886 = vmatpush.bf16.msra.mxu0 %v1388
  %1887 = vmatmul.bf16.gmra.mxu0 %v243
  %v1888 = vpop.f32.mrf.mxu0
  %v1889 = vadd.f32 %v1876, %v1888
  %v1890 = vpop.f32.mrf.mxu0
  %1891 = vdwg.mxu0
  %1892 = vmatpush.bf16.msra.mxu0 %v1418
  %1893 = vmatpush.bf16.msra.mxu0 %v1416
  %1894 = vmatpush.bf16.msra.mxu0 %v1414
  %1895 = vmatpush.bf16.msra.mxu0 %v1412
  %1896 = vmatpush.bf16.msra.mxu0 %v1410
  %1897 = vmatpush.bf16.msra.mxu0 %v1408
  %1898 = vmatpush.bf16.msra.mxu0 %v1406
  %1899 = vmatpush.bf16.msra.mxu0 %v1404
  %1900 = vmatmul.bf16.gmra.mxu0 %v244
  %v1901 = vpop.f32.mrf.mxu0
  %v1902 = vadd.f32 %v1889, %v1901
  %v1903 = vpop.f32.mrf.mxu0
  %1904 = vdwg.mxu0
  %1905 = vmatpush.bf16.msra.mxu0 %v1434
  %1906 = vmatpush.bf16.msra.mxu0 %v1432
  %1907 = vmatpush.bf16.msra.mxu0 %v1430
  %1908 = vmatpush.bf16.msra.mxu0 %v1428
  %1909 = vmatpush.bf16.msra.mxu0 %v1426
  %1910 = vmatpush.bf16.msra.mxu0 %v1424
  %1911 = vmatpush.bf16.msra.mxu0 %v1422
  %1912 = vmatpush.bf16.msra.mxu0 %v1420
  %1913 = vmatmul.bf16.gmra.mxu0 %v245
  %v1914 = vpop.f32.mrf.mxu0
  %v1915 = vadd.f32 %v1902, %v1914
  %v1916 = vpop.f32.mrf.mxu0
  %1917 = vdwg.mxu0
  %1918 = vmatpush.bf16.msra.mxu0 %v1450
  %1919 = vmatpush.bf16.msra.mxu0 %v1448
  %1920 = vmatpush.bf16.msra.mxu0 %v1446
  %1921 = vmatpush.bf16.msra.mxu0 %v1444
  %1922 = vmatpush.bf16.msra.mxu0 %v1442
  %1923 = vmatpush.bf16.msra.mxu0 %v1440
  %1924 = vmatpush.bf16.msra.mxu0 %v1438
  %1925 = vmatpush.bf16.msra.mxu0 %v1436
  %1926 = vmatmul.bf16.gmra.mxu0 %v246
  %v1927 = vpop.f32.mrf.mxu0
  %v1928 = vadd.f32 %v1915, %v1927
  %v1929 = vpop.f32.mrf.mxu0
  %1930 = vdwg.mxu0
  %1931 = vmatpush.bf16.msra.mxu0 %v1466
  %1932 = vmatpush.bf16.msra.mxu0 %v1464
  %1933 = vmatpush.bf16.msra.mxu0 %v1462
  %1934 = vmatpush.bf16.msra.mxu0 %v1460
  %1935 = vmatpush.bf16.msra.mxu0 %v1458
  %1936 = vmatpush.bf16.msra.mxu0 %v1456
  %1937 = vmatpush.bf16.msra.mxu0 %v1454
  %1938 = vmatpush.bf16.msra.mxu0 %v1452
  %1939 = vmatmul.bf16.gmra.mxu0 %v247
  %v1940 = vpop.f32.mrf.mxu0
  %v1941 = vadd.f32 %v1928, %v1940
  %v1942 = vpop.f32.mrf.mxu0
  %1943 = vdwg.mxu0
  %1944 = vmatpush.bf16.msra.mxu0 %v1482
  %1945 = vmatpush.bf16.msra.mxu0 %v1480
  %1946 = vmatpush.bf16.msra.mxu0 %v1478
  %1947 = vmatpush.bf16.msra.mxu0 %v1476
  %1948 = vmatpush.bf16.msra.mxu0 %v1474
  %1949 = vmatpush.bf16.msra.mxu0 %v1472
  %1950 = vmatpush.bf16.msra.mxu0 %v1470
  %1951 = vmatpush.bf16.msra.mxu0 %v1468
  %1952 = vmatmul.bf16.gmra.mxu0 %v248
  %v1953 = vpop.f32.mrf.mxu0
  %v1954 = vadd.f32 %v1941, %v1953
  %v1955 = vpop.f32.mrf.mxu0
  %1956 = vdwg.mxu0
  %1957 = vmatpush.bf16.msra.mxu0 %v1498
  %1958 = vmatpush.bf16.msra.mxu0 %v1496
  %1959 = vmatpush.bf16.msra.mxu0 %v1494
  %1960 = vmatpush.bf16.msra.mxu0 %v1492
  %1961 = vmatpush.bf16.msra.mxu0 %v1490
  %1962 = vmatpush.bf16.msra.mxu0 %v1488
  %1963 = vmatpush.bf16.msra.mxu0 %v1486
  %1964 = vmatpush.bf16.msra.mxu0 %v1484
  %1965 = vmatmul.bf16.gmra.mxu0 %v249
  %v1966 = vpop.f32.mrf.mxu0
  %v1967 = vadd.f32 %v1954, %v1966
  %v1968 = vpop.f32.mrf.mxu0
  %1969 = vdwg.mxu0
  %1970 = vmatpush.bf16.msra.mxu0 %v1514
  %1971 = vmatpush.bf16.msra.mxu0 %v1512
  %1972 = vmatpush.bf16.msra.mxu0 %v1510
  %1973 = vmatpush.bf16.msra.mxu0 %v1508
  %1974 = vmatpush.bf16.msra.mxu0 %v1506
  %1975 = vmatpush.bf16.msra.mxu0 %v1504
  %1976 = vmatpush.bf16.msra.mxu0 %v1502
  %1977 = vmatpush.bf16.msra.mxu0 %v1500
  %1978 = vmatmul.bf16.gmra.mxu0 %v250
  %v1979 = vpop.f32.mrf.mxu0
  %v1980 = vadd.f32 %v1967, %v1979
  %v1981 = vpop.f32.mrf.mxu0
  %1982 = vdwg.mxu0
  %1983 = vmatpush.bf16.msra.mxu0 %v1530
  %1984 = vmatpush.bf16.msra.mxu0 %v1528
  %1985 = vmatpush.bf16.msra.mxu0 %v1526
  %1986 = vmatpush.bf16.msra.mxu0 %v1524
  %1987 = vmatpush.bf16.msra.mxu0 %v1522
  %1988 = vmatpush.bf16.msra.mxu0 %v1520
  %1989 = vmatpush.bf16.msra.mxu0 %v1518
  %1990 = vmatpush.bf16.msra.mxu0 %v1516
  %1991 = vmatmul.bf16.gmra.mxu0 %v251
  %v1992 = vpop.f32.mrf.mxu0
  %v1993 = vadd.f32 %v1980, %v1992
  %v1994 = vpop.f32.mrf.mxu0
  %1995 = vdwg.mxu0
  %1996 = vmatpush.bf16.msra.mxu0 %v1291
  %1997 = vmatpush.bf16.msra.mxu0 %v1289
  %1998 = vmatpush.bf16.msra.mxu0 %v1287
  %1999 = vmatpush.bf16.msra.mxu0 %v1285
  %2000 = vmatpush.bf16.msra.mxu0 %v1283
  %2001 = vmatpush.bf16.msra.mxu0 %v1281
  %2002 = vmatpush.bf16.msra.mxu0 %v1279
  %2003 = vmatpush.bf16.msra.mxu0 %v1277
  %2004 = vmatmul.bf16.gmra.mxu0 %v236
  %v2005 = vpop.f32.mrf.mxu0
  %v2006 = vadd.f32 0.0, %v2005
  %v2007 = vpop.f32.mrf.mxu0
  %2008 = vdwg.mxu0
  %2009 = vmatpush.bf16.msra.mxu0 %v1307
  %2010 = vmatpush.bf16.msra.mxu0 %v1305
  %2011 = vmatpush.bf16.msra.mxu0 %v1303
  %2012 = vmatpush.bf16.msra.mxu0 %v1301
  %2013 = vmatpush.bf16.msra.mxu0 %v1299
  %2014 = vmatpush.bf16.msra.mxu0 %v1297
  %2015 = vmatpush.bf16.msra.mxu0 %v1295
  %2016 = vmatpush.bf16.msra.mxu0 %v1293
  %2017 = vmatmul.bf16.gmra.mxu0 %v237
  %v2018 = vpop.f32.mrf.mxu0
  %v2019 = vadd.f32 %v2006, %v2018
  %v2020 = vpop.f32.mrf.mxu0
  %2021 = vdwg.mxu0
  %2022 = vmatpush.bf16.msra.mxu0 %v1323
  %2023 = vmatpush.bf16.msra.mxu0 %v1321
  %2024 = vmatpush.bf16.msra.mxu0 %v1319
  %2025 = vmatpush.bf16.msra.mxu0 %v1317
  %2026 = vmatpush.bf16.msra.mxu0 %v1315
  %2027 = vmatpush.bf16.msra.mxu0 %v1313
  %2028 = vmatpush.bf16.msra.mxu0 %v1311
  %2029 = vmatpush.bf16.msra.mxu0 %v1309
  %2030 = vmatmul.bf16.gmra.mxu0 %v238
  %v2031 = vpop.f32.mrf.mxu0
  %v2032 = vadd.f32 %v2019, %v2031
  %v2033 = vpop.f32.mrf.mxu0
  %2034 = vdwg.mxu0
  %2035 = vmatpush.bf16.msra.mxu0 %v1339
  %2036 = vmatpush.bf16.msra.mxu0 %v1337
  %2037 = vmatpush.bf16.msra.mxu0 %v1335
  %2038 = vmatpush.bf16.msra.mxu0 %v1333
  %2039 = vmatpush.bf16.msra.mxu0 %v1331
  %2040 = vmatpush.bf16.msra.mxu0 %v1329
  %2041 = vmatpush.bf16.msra.mxu0 %v1327
  %2042 = vmatpush.bf16.msra.mxu0 %v1325
  %2043 = vmatmul.bf16.gmra.mxu0 %v239
  %v2044 = vpop.f32.mrf.mxu0
  %v2045 = vadd.f32 %v2032, %v2044
  %v2046 = vpop.f32.mrf.mxu0
  %2047 = vdwg.mxu0
  %2048 = vmatpush.bf16.msra.mxu0 %v1355
  %2049 = vmatpush.bf16.msra.mxu0 %v1353
  %2050 = vmatpush.bf16.msra.mxu0 %v1351
  %2051 = vmatpush.bf16.msra.mxu0 %v1349
  %2052 = vmatpush.bf16.msra.mxu0 %v1347
  %2053 = vmatpush.bf16.msra.mxu0 %v1345
  %2054 = vmatpush.bf16.msra.mxu0 %v1343
  %2055 = vmatpush.bf16.msra.mxu0 %v1341
  %2056 = vmatmul.bf16.gmra.mxu0 %v240
  %v2057 = vpop.f32.mrf.mxu0
  %v2058 = vadd.f32 %v2045, %v2057
  %v2059 = vpop.f32.mrf.mxu0
  %2060 = vdwg.mxu0
  %2061 = vmatpush.bf16.msra.mxu0 %v1371
  %2062 = vmatpush.bf16.msra.mxu0 %v1369
  %2063 = vmatpush.bf16.msra.mxu0 %v1367
  %2064 = vmatpush.bf16.msra.mxu0 %v1365
  %2065 = vmatpush.bf16.msra.mxu0 %v1363
  %2066 = vmatpush.bf16.msra.mxu0 %v1361
  %2067 = vmatpush.bf16.msra.mxu0 %v1359
  %2068 = vmatpush.bf16.msra.mxu0 %v1357
  %2069 = vmatmul.bf16.gmra.mxu0 %v241
  %v2070 = vpop.f32.mrf.mxu0
  %v2071 = vadd.f32 %v2058, %v2070
  %v2072 = vpop.f32.mrf.mxu0
  %2073 = vdwg.mxu0
  %2074 = vmatpush.bf16.msra.mxu0 %v1387
  %2075 = vmatpush.bf16.msra.mxu0 %v1385
  %2076 = vmatpush.bf16.msra.mxu0 %v1383
  %2077 = vmatpush.bf16.msra.mxu0 %v1381
  %2078 = vmatpush.bf16.msra.mxu0 %v1379
  %2079 = vmatpush.bf16.msra.mxu0 %v1377
  %2080 = vmatpush.bf16.msra.mxu0 %v1375
  %2081 = vmatpush.bf16.msra.mxu0 %v1373
  %2082 = vmatmul.bf16.gmra.mxu0 %v242
  %v2083 = vpop.f32.mrf.mxu0
  %v2084 = vadd.f32 %v2071, %v2083
  %v2085 = vpop.f32.mrf.mxu0
  %2086 = vdwg.mxu0
  %2087 = vmatpush.bf16.msra.mxu0 %v1403
  %2088 = vmatpush.bf16.msra.mxu0 %v1401
  %2089 = vmatpush.bf16.msra.mxu0 %v1399
  %2090 = vmatpush.bf16.msra.mxu0 %v1397
  %2091 = vmatpush.bf16.msra.mxu0 %v1395
  %2092 = vmatpush.bf16.msra.mxu0 %v1393
  %2093 = vmatpush.bf16.msra.mxu0 %v1391
  %2094 = vmatpush.bf16.msra.mxu0 %v1389
  %2095 = vmatmul.bf16.gmra.mxu0 %v243
  %v2096 = vpop.f32.mrf.mxu0
  %v2097 = vadd.f32 %v2084, %v2096
  %v2098 = vpop.f32.mrf.mxu0
  %2099 = vdwg.mxu0
  %2100 = vmatpush.bf16.msra.mxu0 %v1419
  %2101 = vmatpush.bf16.msra.mxu0 %v1417
  %2102 = vmatpush.bf16.msra.mxu0 %v1415
  %2103 = vmatpush.bf16.msra.mxu0 %v1413
  %2104 = vmatpush.bf16.msra.mxu0 %v1411
  %2105 = vmatpush.bf16.msra.mxu0 %v1409
  %2106 = vmatpush.bf16.msra.mxu0 %v1407
  %2107 = vmatpush.bf16.msra.mxu0 %v1405
  %2108 = vmatmul.bf16.gmra.mxu0 %v244
  %v2109 = vpop.f32.mrf.mxu0
  %v2110 = vadd.f32 %v2097, %v2109
  %v2111 = vpop.f32.mrf.mxu0
  %2112 = vdwg.mxu0
  %2113 = vmatpush.bf16.msra.mxu0 %v1435
  %2114 = vmatpush.bf16.msra.mxu0 %v1433
  %2115 = vmatpush.bf16.msra.mxu0 %v1431
  %2116 = vmatpush.bf16.msra.mxu0 %v1429
  %2117 = vmatpush.bf16.msra.mxu0 %v1427
  %2118 = vmatpush.bf16.msra.mxu0 %v1425
  %2119 = vmatpush.bf16.msra.mxu0 %v1423
  %2120 = vmatpush.bf16.msra.mxu0 %v1421
  %2121 = vmatmul.bf16.gmra.mxu0 %v245
  %v2122 = vpop.f32.mrf.mxu0
  %v2123 = vadd.f32 %v2110, %v2122
  %v2124 = vpop.f32.mrf.mxu0
  %2125 = vdwg.mxu0
  %2126 = vmatpush.bf16.msra.mxu0 %v1451
  %2127 = vmatpush.bf16.msra.mxu0 %v1449
  %2128 = vmatpush.bf16.msra.mxu0 %v1447
  %2129 = vmatpush.bf16.msra.mxu0 %v1445
  %2130 = vmatpush.bf16.msra.mxu0 %v1443
  %2131 = vmatpush.bf16.msra.mxu0 %v1441
  %2132 = vmatpush.bf16.msra.mxu0 %v1439
  %2133 = vmatpush.bf16.msra.mxu0 %v1437
  %2134 = vmatmul.bf16.gmra.mxu0 %v246
  %v2135 = vpop.f32.mrf.mxu0
  %v2136 = vadd.f32 %v2123, %v2135
  %v2137 = vpop.f32.mrf.mxu0
  %2138 = vdwg.mxu0
  %2139 = vmatpush.bf16.msra.mxu0 %v1467
  %2140 = vmatpush.bf16.msra.mxu0 %v1465
  %2141 = vmatpush.bf16.msra.mxu0 %v1463
  %2142 = vmatpush.bf16.msra.mxu0 %v1461
  %2143 = vmatpush.bf16.msra.mxu0 %v1459
  %2144 = vmatpush.bf16.msra.mxu0 %v1457
  %2145 = vmatpush.bf16.msra.mxu0 %v1455
  %2146 = vmatpush.bf16.msra.mxu0 %v1453
  %2147 = vmatmul.bf16.gmra.mxu0 %v247
  %v2148 = vpop.f32.mrf.mxu0
  %v2149 = vadd.f32 %v2136, %v2148
  %v2150 = vpop.f32.mrf.mxu0
  %2151 = vdwg.mxu0
  %2152 = vmatpush.bf16.msra.mxu0 %v1483
  %2153 = vmatpush.bf16.msra.mxu0 %v1481
  %2154 = vmatpush.bf16.msra.mxu0 %v1479
  %2155 = vmatpush.bf16.msra.mxu0 %v1477
  %2156 = vmatpush.bf16.msra.mxu0 %v1475
  %2157 = vmatpush.bf16.msra.mxu0 %v1473
  %2158 = vmatpush.bf16.msra.mxu0 %v1471
  %2159 = vmatpush.bf16.msra.mxu0 %v1469
  %2160 = vmatmul.bf16.gmra.mxu0 %v248
  %v2161 = vpop.f32.mrf.mxu0
  %v2162 = vadd.f32 %v2149, %v2161
  %v2163 = vpop.f32.mrf.mxu0
  %2164 = vdwg.mxu0
  %2165 = vmatpush.bf16.msra.mxu0 %v1499
  %2166 = vmatpush.bf16.msra.mxu0 %v1497
  %2167 = vmatpush.bf16.msra.mxu0 %v1495
  %2168 = vmatpush.bf16.msra.mxu0 %v1493
  %2169 = vmatpush.bf16.msra.mxu0 %v1491
  %2170 = vmatpush.bf16.msra.mxu0 %v1489
  %2171 = vmatpush.bf16.msra.mxu0 %v1487
  %2172 = vmatpush.bf16.msra.mxu0 %v1485
  %2173 = vmatmul.bf16.gmra.mxu0 %v249
  %v2174 = vpop.f32.mrf.mxu0
  %v2175 = vadd.f32 %v2162, %v2174
  %v2176 = vpop.f32.mrf.mxu0
  %2177 = vdwg.mxu0
  %2178 = vmatpush.bf16.msra.mxu0 %v1515
  %2179 = vmatpush.bf16.msra.mxu0 %v1513
  %2180 = vmatpush.bf16.msra.mxu0 %v1511
  %2181 = vmatpush.bf16.msra.mxu0 %v1509
  %2182 = vmatpush.bf16.msra.mxu0 %v1507
  %2183 = vmatpush.bf16.msra.mxu0 %v1505
  %2184 = vmatpush.bf16.msra.mxu0 %v1503
  %2185 = vmatpush.bf16.msra.mxu0 %v1501
  %2186 = vmatmul.bf16.gmra.mxu0 %v250
  %v2187 = vpop.f32.mrf.mxu0
  %v2188 = vadd.f32 %v2175, %v2187
  %v2189 = vpop.f32.mrf.mxu0
  %2190 = vdwg.mxu0
  %2191 = vmatpush.bf16.msra.mxu0 %v1531
  %2192 = vmatpush.bf16.msra.mxu0 %v1529
  %2193 = vmatpush.bf16.msra.mxu0 %v1527
  %2194 = vmatpush.bf16.msra.mxu0 %v1525
  %2195 = vmatpush.bf16.msra.mxu0 %v1523
  %2196 = vmatpush.bf16.msra.mxu0 %v1521
  %2197 = vmatpush.bf16.msra.mxu0 %v1519
  %2198 = vmatpush.bf16.msra.mxu0 %v1517
  %2199 = vmatmul.bf16.gmra.mxu0 %v251
  %v2200 = vpop.f32.mrf.mxu0
  %v2201 = vadd.f32 %v2188, %v2200
  %v2202 = vpop.f32.mrf.mxu0
  %2203 = vdwg.mxu0
  %v2212 = vunpack.c.l.b16 %v124
  %v2213 = vunpack.c.h.b16 %v124
  %v2214 = vunpack.c.l.b16 %v125
  %v2215 = vunpack.c.h.b16 %v125
  %v2216 = vunpack.c.l.b16 %v126
  %v2217 = vunpack.c.h.b16 %v126
  %v2218 = vunpack.c.l.b16 %v127
  %v2219 = vunpack.c.h.b16 %v127
  %v2220 = vunpack.c.l.b16 %v128
  %v2221 = vunpack.c.h.b16 %v128
  %v2222 = vunpack.c.l.b16 %v129
  %v2223 = vunpack.c.h.b16 %v129
  %v2224 = vunpack.c.l.b16 %v130
  %v2225 = vunpack.c.h.b16 %v130
  %v2226 = vunpack.c.l.b16 %v131
  %v2227 = vunpack.c.h.b16 %v131
  %v2228 = vpack.c.b16 %v2212, %v2212
  %v2229 = vpack.c.b16 %v2213, %v2213
  %v2230 = vpack.c.b16 %v2214, %v2214
  %v2231 = vpack.c.b16 %v2215, %v2215
  %v2232 = vpack.c.b16 %v2216, %v2216
  %v2233 = vpack.c.b16 %v2217, %v2217
  %v2234 = vpack.c.b16 %v2218, %v2218
  %v2235 = vpack.c.b16 %v2219, %v2219
  %v2236 = vpack.c.b16 %v2220, %v2220
  %v2237 = vpack.c.b16 %v2221, %v2221
  %v2238 = vpack.c.b16 %v2222, %v2222
  %v2239 = vpack.c.b16 %v2223, %v2223
  %v2240 = vpack.c.b16 %v2224, %v2224
  %v2241 = vpack.c.b16 %v2225, %v2225
  %v2242 = vpack.c.b16 %v2226, %v2226
  %v2243 = vpack.c.b16 %v2227, %v2227
  %2260 = vmatpush.bf16.msra.mxu0 %v1290
  %2261 = vmatpush.bf16.msra.mxu0 %v1288
  %2262 = vmatpush.bf16.msra.mxu0 %v1286
  %2263 = vmatpush.bf16.msra.mxu0 %v1284
  %2264 = vmatpush.bf16.msra.mxu0 %v1282
  %2265 = vmatpush.bf16.msra.mxu0 %v1280
  %2266 = vmatpush.bf16.msra.mxu0 %v1278
  %2267 = vmatpush.bf16.msra.mxu0 %v1276
  %2268 = vmatmul.bf16.gmra.mxu0 %v2228
  %v2269 = vpop.f32.mrf.mxu0
  %v2270 = vadd.f32 %v1993, %v2269
  %v2271 = vpop.f32.mrf.mxu0
  %2272 = vdwg.mxu0
  %2273 = vmatpush.bf16.msra.mxu0 %v1306
  %2274 = vmatpush.bf16.msra.mxu0 %v1304
  %2275 = vmatpush.bf16.msra.mxu0 %v1302
  %2276 = vmatpush.bf16.msra.mxu0 %v1300
  %2277 = vmatpush.bf16.msra.mxu0 %v1298
  %2278 = vmatpush.bf16.msra.mxu0 %v1296
  %2279 = vmatpush.bf16.msra.mxu0 %v1294
  %2280 = vmatpush.bf16.msra.mxu0 %v1292
  %2281 = vmatmul.bf16.gmra.mxu0 %v2229
  %v2282 = vpop.f32.mrf.mxu0
  %v2283 = vadd.f32 %v2270, %v2282
  %v2284 = vpop.f32.mrf.mxu0
  %2285 = vdwg.mxu0
  %2286 = vmatpush.bf16.msra.mxu0 %v1322
  %2287 = vmatpush.bf16.msra.mxu0 %v1320
  %2288 = vmatpush.bf16.msra.mxu0 %v1318
  %2289 = vmatpush.bf16.msra.mxu0 %v1316
  %2290 = vmatpush.bf16.msra.mxu0 %v1314
  %2291 = vmatpush.bf16.msra.mxu0 %v1312
  %2292 = vmatpush.bf16.msra.mxu0 %v1310
  %2293 = vmatpush.bf16.msra.mxu0 %v1308
  %2294 = vmatmul.bf16.gmra.mxu0 %v2230
  %v2295 = vpop.f32.mrf.mxu0
  %v2296 = vadd.f32 %v2283, %v2295
  %v2297 = vpop.f32.mrf.mxu0
  %2298 = vdwg.mxu0
  %2299 = vmatpush.bf16.msra.mxu0 %v1338
  %2300 = vmatpush.bf16.msra.mxu0 %v1336
  %2301 = vmatpush.bf16.msra.mxu0 %v1334
  %2302 = vmatpush.bf16.msra.mxu0 %v1332
  %2303 = vmatpush.bf16.msra.mxu0 %v1330
  %2304 = vmatpush.bf16.msra.mxu0 %v1328
  %2305 = vmatpush.bf16.msra.mxu0 %v1326
  %2306 = vmatpush.bf16.msra.mxu0 %v1324
  %2307 = vmatmul.bf16.gmra.mxu0 %v2231
  %v2308 = vpop.f32.mrf.mxu0
  %v2309 = vadd.f32 %v2296, %v2308
  %v2310 = vpop.f32.mrf.mxu0
  %2311 = vdwg.mxu0
  %2312 = vmatpush.bf16.msra.mxu0 %v1354
  %2313 = vmatpush.bf16.msra.mxu0 %v1352
  %2314 = vmatpush.bf16.msra.mxu0 %v1350
  %2315 = vmatpush.bf16.msra.mxu0 %v1348
  %2316 = vmatpush.bf16.msra.mxu0 %v1346
  %2317 = vmatpush.bf16.msra.mxu0 %v1344
  %2318 = vmatpush.bf16.msra.mxu0 %v1342
  %2319 = vmatpush.bf16.msra.mxu0 %v1340
  %2320 = vmatmul.bf16.gmra.mxu0 %v2232
  %v2321 = vpop.f32.mrf.mxu0
  %v2322 = vadd.f32 %v2309, %v2321
  %v2323 = vpop.f32.mrf.mxu0
  %2324 = vdwg.mxu0
  %2325 = vmatpush.bf16.msra.mxu0 %v1370
  %2326 = vmatpush.bf16.msra.mxu0 %v1368
  %2327 = vmatpush.bf16.msra.mxu0 %v1366
  %2328 = vmatpush.bf16.msra.mxu0 %v1364
  %2329 = vmatpush.bf16.msra.mxu0 %v1362
  %2330 = vmatpush.bf16.msra.mxu0 %v1360
  %2331 = vmatpush.bf16.msra.mxu0 %v1358
  %2332 = vmatpush.bf16.msra.mxu0 %v1356
  %2333 = vmatmul.bf16.gmra.mxu0 %v2233
  %v2334 = vpop.f32.mrf.mxu0
  %v2335 = vadd.f32 %v2322, %v2334
  %v2336 = vpop.f32.mrf.mxu0
  %2337 = vdwg.mxu0
  %2338 = vmatpush.bf16.msra.mxu0 %v1386
  %2339 = vmatpush.bf16.msra.mxu0 %v1384
  %2340 = vmatpush.bf16.msra.mxu0 %v1382
  %2341 = vmatpush.bf16.msra.mxu0 %v1380
  %2342 = vmatpush.bf16.msra.mxu0 %v1378
  %2343 = vmatpush.bf16.msra.mxu0 %v1376
  %2344 = vmatpush.bf16.msra.mxu0 %v1374
  %2345 = vmatpush.bf16.msra.mxu0 %v1372
  %2346 = vmatmul.bf16.gmra.mxu0 %v2234
  %v2347 = vpop.f32.mrf.mxu0
  %v2348 = vadd.f32 %v2335, %v2347
  %v2349 = vpop.f32.mrf.mxu0
  %2350 = vdwg.mxu0
  %2351 = vmatpush.bf16.msra.mxu0 %v1402
  %2352 = vmatpush.bf16.msra.mxu0 %v1400
  %2353 = vmatpush.bf16.msra.mxu0 %v1398
  %2354 = vmatpush.bf16.msra.mxu0 %v1396
  %2355 = vmatpush.bf16.msra.mxu0 %v1394
  %2356 = vmatpush.bf16.msra.mxu0 %v1392
  %2357 = vmatpush.bf16.msra.mxu0 %v1390
  %2358 = vmatpush.bf16.msra.mxu0 %v1388
  %2359 = vmatmul.bf16.gmra.mxu0 %v2235
  %v2360 = vpop.f32.mrf.mxu0
  %v2361 = vadd.f32 %v2348, %v2360
  %v2362 = vpop.f32.mrf.mxu0
  %2363 = vdwg.mxu0
  %2364 = vmatpush.bf16.msra.mxu0 %v1418
  %2365 = vmatpush.bf16.msra.mxu0 %v1416
  %2366 = vmatpush.bf16.msra.mxu0 %v1414
  %2367 = vmatpush.bf16.msra.mxu0 %v1412
  %2368 = vmatpush.bf16.msra.mxu0 %v1410
  %2369 = vmatpush.bf16.msra.mxu0 %v1408
  %2370 = vmatpush.bf16.msra.mxu0 %v1406
  %2371 = vmatpush.bf16.msra.mxu0 %v1404
  %2372 = vmatmul.bf16.gmra.mxu0 %v2236
  %v2373 = vpop.f32.mrf.mxu0
  %v2374 = vadd.f32 %v2361, %v2373
  %v2375 = vpop.f32.mrf.mxu0
  %2376 = vdwg.mxu0
  %2377 = vmatpush.bf16.msra.mxu0 %v1434
  %2378 = vmatpush.bf16.msra.mxu0 %v1432
  %2379 = vmatpush.bf16.msra.mxu0 %v1430
  %2380 = vmatpush.bf16.msra.mxu0 %v1428
  %2381 = vmatpush.bf16.msra.mxu0 %v1426
  %2382 = vmatpush.bf16.msra.mxu0 %v1424
  %2383 = vmatpush.bf16.msra.mxu0 %v1422
  %2384 = vmatpush.bf16.msra.mxu0 %v1420
  %2385 = vmatmul.bf16.gmra.mxu0 %v2237
  %v2386 = vpop.f32.mrf.mxu0
  %v2387 = vadd.f32 %v2374, %v2386
  %v2388 = vpop.f32.mrf.mxu0
  %2389 = vdwg.mxu0
  %2390 = vmatpush.bf16.msra.mxu0 %v1450
  %2391 = vmatpush.bf16.msra.mxu0 %v1448
  %2392 = vmatpush.bf16.msra.mxu0 %v1446
  %2393 = vmatpush.bf16.msra.mxu0 %v1444
  %2394 = vmatpush.bf16.msra.mxu0 %v1442
  %2395 = vmatpush.bf16.msra.mxu0 %v1440
  %2396 = vmatpush.bf16.msra.mxu0 %v1438
  %2397 = vmatpush.bf16.msra.mxu0 %v1436
  %2398 = vmatmul.bf16.gmra.mxu0 %v2238
  %v2399 = vpop.f32.mrf.mxu0
  %v2400 = vadd.f32 %v2387, %v2399
  %v2401 = vpop.f32.mrf.mxu0
  %2402 = vdwg.mxu0
  %2403 = vmatpush.bf16.msra.mxu0 %v1466
  %2404 = vmatpush.bf16.msra.mxu0 %v1464
  %2405 = vmatpush.bf16.msra.mxu0 %v1462
  %2406 = vmatpush.bf16.msra.mxu0 %v1460
  %2407 = vmatpush.bf16.msra.mxu0 %v1458
  %2408 = vmatpush.bf16.msra.mxu0 %v1456
  %2409 = vmatpush.bf16.msra.mxu0 %v1454
  %2410 = vmatpush.bf16.msra.mxu0 %v1452
  %2411 = vmatmul.bf16.gmra.mxu0 %v2239
  %v2412 = vpop.f32.mrf.mxu0
  %v2413 = vadd.f32 %v2400, %v2412
  %v2414 = vpop.f32.mrf.mxu0
  %2415 = vdwg.mxu0
  %2416 = vmatpush.bf16.msra.mxu0 %v1482
  %2417 = vmatpush.bf16.msra.mxu0 %v1480
  %2418 = vmatpush.bf16.msra.mxu0 %v1478
  %2419 = vmatpush.bf16.msra.mxu0 %v1476
  %2420 = vmatpush.bf16.msra.mxu0 %v1474
  %2421 = vmatpush.bf16.msra.mxu0 %v1472
  %2422 = vmatpush.bf16.msra.mxu0 %v1470
  %2423 = vmatpush.bf16.msra.mxu0 %v1468
  %2424 = vmatmul.bf16.gmra.mxu0 %v2240
  %v2425 = vpop.f32.mrf.mxu0
  %v2426 = vadd.f32 %v2413, %v2425
  %v2427 = vpop.f32.mrf.mxu0
  %2428 = vdwg.mxu0
  %2429 = vmatpush.bf16.msra.mxu0 %v1498
  %2430 = vmatpush.bf16.msra.mxu0 %v1496
  %2431 = vmatpush.bf16.msra.mxu0 %v1494
  %2432 = vmatpush.bf16.msra.mxu0 %v1492
  %2433 = vmatpush.bf16.msra.mxu0 %v1490
  %2434 = vmatpush.bf16.msra.mxu0 %v1488
  %2435 = vmatpush.bf16.msra.mxu0 %v1486
  %2436 = vmatpush.bf16.msra.mxu0 %v1484
  %2437 = vmatmul.bf16.gmra.mxu0 %v2241
  %v2438 = vpop.f32.mrf.mxu0
  %v2439 = vadd.f32 %v2426, %v2438
  %v2440 = vpop.f32.mrf.mxu0
  %2441 = vdwg.mxu0
  %2442 = vmatpush.bf16.msra.mxu0 %v1514
  %2443 = vmatpush.bf16.msra.mxu0 %v1512
  %2444 = vmatpush.bf16.msra.mxu0 %v1510
  %2445 = vmatpush.bf16.msra.mxu0 %v1508
  %2446 = vmatpush.bf16.msra.mxu0 %v1506
  %2447 = vmatpush.bf16.msra.mxu0 %v1504
  %2448 = vmatpush.bf16.msra.mxu0 %v1502
  %2449 = vmatpush.bf16.msra.mxu0 %v1500
  %2450 = vmatmul.bf16.gmra.mxu0 %v2242
  %v2451 = vpop.f32.mrf.mxu0
  %v2452 = vadd.f32 %v2439, %v2451
  %v2453 = vpop.f32.mrf.mxu0
  %2454 = vdwg.mxu0
  %2455 = vmatpush.bf16.msra.mxu0 %v1530
  %2456 = vmatpush.bf16.msra.mxu0 %v1528
  %2457 = vmatpush.bf16.msra.mxu0 %v1526
  %2458 = vmatpush.bf16.msra.mxu0 %v1524
  %2459 = vmatpush.bf16.msra.mxu0 %v1522
  %2460 = vmatpush.bf16.msra.mxu0 %v1520
  %2461 = vmatpush.bf16.msra.mxu0 %v1518
  %2462 = vmatpush.bf16.msra.mxu0 %v1516
  %2463 = vmatmul.bf16.gmra.mxu0 %v2243
  %v2464 = vpop.f32.mrf.mxu0
  %v2465 = vadd.f32 %v2452, %v2464
  %v2466 = vpop.f32.mrf.mxu0
  %2467 = vdwg.mxu0
  %2468 = vmatpush.bf16.msra.mxu0 %v1291
  %2469 = vmatpush.bf16.msra.mxu0 %v1289
  %2470 = vmatpush.bf16.msra.mxu0 %v1287
  %2471 = vmatpush.bf16.msra.mxu0 %v1285
  %2472 = vmatpush.bf16.msra.mxu0 %v1283
  %2473 = vmatpush.bf16.msra.mxu0 %v1281
  %2474 = vmatpush.bf16.msra.mxu0 %v1279
  %2475 = vmatpush.bf16.msra.mxu0 %v1277
  %2476 = vmatmul.bf16.gmra.mxu0 %v2228
  %v2477 = vpop.f32.mrf.mxu0
  %v2478 = vadd.f32 %v2201, %v2477
  %v2479 = vpop.f32.mrf.mxu0
  %2480 = vdwg.mxu0
  %2481 = vmatpush.bf16.msra.mxu0 %v1307
  %2482 = vmatpush.bf16.msra.mxu0 %v1305
  %2483 = vmatpush.bf16.msra.mxu0 %v1303
  %2484 = vmatpush.bf16.msra.mxu0 %v1301
  %2485 = vmatpush.bf16.msra.mxu0 %v1299
  %2486 = vmatpush.bf16.msra.mxu0 %v1297
  %2487 = vmatpush.bf16.msra.mxu0 %v1295
  %2488 = vmatpush.bf16.msra.mxu0 %v1293
  %2489 = vmatmul.bf16.gmra.mxu0 %v2229
  %v2490 = vpop.f32.mrf.mxu0
  %v2491 = vadd.f32 %v2478, %v2490
  %v2492 = vpop.f32.mrf.mxu0
  %2493 = vdwg.mxu0
  %2494 = vmatpush.bf16.msra.mxu0 %v1323
  %2495 = vmatpush.bf16.msra.mxu0 %v1321
  %2496 = vmatpush.bf16.msra.mxu0 %v1319
  %2497 = vmatpush.bf16.msra.mxu0 %v1317
  %2498 = vmatpush.bf16.msra.mxu0 %v1315
  %2499 = vmatpush.bf16.msra.mxu0 %v1313
  %2500 = vmatpush.bf16.msra.mxu0 %v1311
  %2501 = vmatpush.bf16.msra.mxu0 %v1309
  %2502 = vmatmul.bf16.gmra.mxu0 %v2230
  %v2503 = vpop.f32.mrf.mxu0
  %v2504 = vadd.f32 %v2491, %v2503
  %v2505 = vpop.f32.mrf.mxu0
  %2506 = vdwg.mxu0
  %2507 = vmatpush.bf16.msra.mxu0 %v1339
  %2508 = vmatpush.bf16.msra.mxu0 %v1337
  %2509 = vmatpush.bf16.msra.mxu0 %v1335
  %2510 = vmatpush.bf16.msra.mxu0 %v1333
  %2511 = vmatpush.bf16.msra.mxu0 %v1331
  %2512 = vmatpush.bf16.msra.mxu0 %v1329
  %2513 = vmatpush.bf16.msra.mxu0 %v1327
  %2514 = vmatpush.bf16.msra.mxu0 %v1325
  %2515 = vmatmul.bf16.gmra.mxu0 %v2231
  %v2516 = vpop.f32.mrf.mxu0
  %v2517 = vadd.f32 %v2504, %v2516
  %v2518 = vpop.f32.mrf.mxu0
  %2519 = vdwg.mxu0
  %2520 = vmatpush.bf16.msra.mxu0 %v1355
  %2521 = vmatpush.bf16.msra.mxu0 %v1353
  %2522 = vmatpush.bf16.msra.mxu0 %v1351
  %2523 = vmatpush.bf16.msra.mxu0 %v1349
  %2524 = vmatpush.bf16.msra.mxu0 %v1347
  %2525 = vmatpush.bf16.msra.mxu0 %v1345
  %2526 = vmatpush.bf16.msra.mxu0 %v1343
  %2527 = vmatpush.bf16.msra.mxu0 %v1341
  %2528 = vmatmul.bf16.gmra.mxu0 %v2232
  %v2529 = vpop.f32.mrf.mxu0
  %v2530 = vadd.f32 %v2517, %v2529
  %v2531 = vpop.f32.mrf.mxu0
  %2532 = vdwg.mxu0
  %2533 = vmatpush.bf16.msra.mxu0 %v1371
  %2534 = vmatpush.bf16.msra.mxu0 %v1369
  %2535 = vmatpush.bf16.msra.mxu0 %v1367
  %2536 = vmatpush.bf16.msra.mxu0 %v1365
  %2537 = vmatpush.bf16.msra.mxu0 %v1363
  %2538 = vmatpush.bf16.msra.mxu0 %v1361
  %2539 = vmatpush.bf16.msra.mxu0 %v1359
  %2540 = vmatpush.bf16.msra.mxu0 %v1357
  %2541 = vmatmul.bf16.gmra.mxu0 %v2233
  %v2542 = vpop.f32.mrf.mxu0
  %v2543 = vadd.f32 %v2530, %v2542
  %v2544 = vpop.f32.mrf.mxu0
  %2545 = vdwg.mxu0
  %2546 = vmatpush.bf16.msra.mxu0 %v1387
  %2547 = vmatpush.bf16.msra.mxu0 %v1385
  %2548 = vmatpush.bf16.msra.mxu0 %v1383
  %2549 = vmatpush.bf16.msra.mxu0 %v1381
  %2550 = vmatpush.bf16.msra.mxu0 %v1379
  %2551 = vmatpush.bf16.msra.mxu0 %v1377
  %2552 = vmatpush.bf16.msra.mxu0 %v1375
  %2553 = vmatpush.bf16.msra.mxu0 %v1373
  %2554 = vmatmul.bf16.gmra.mxu0 %v2234
  %v2555 = vpop.f32.mrf.mxu0
  %v2556 = vadd.f32 %v2543, %v2555
  %v2557 = vpop.f32.mrf.mxu0
  %2558 = vdwg.mxu0
  %2559 = vmatpush.bf16.msra.mxu0 %v1403
  %2560 = vmatpush.bf16.msra.mxu0 %v1401
  %2561 = vmatpush.bf16.msra.mxu0 %v1399
  %2562 = vmatpush.bf16.msra.mxu0 %v1397
  %2563 = vmatpush.bf16.msra.mxu0 %v1395
  %2564 = vmatpush.bf16.msra.mxu0 %v1393
  %2565 = vmatpush.bf16.msra.mxu0 %v1391
  %2566 = vmatpush.bf16.msra.mxu0 %v1389
  %2567 = vmatmul.bf16.gmra.mxu0 %v2235
  %v2568 = vpop.f32.mrf.mxu0
  %v2569 = vadd.f32 %v2556, %v2568
  %v2570 = vpop.f32.mrf.mxu0
  %2571 = vdwg.mxu0
  %2572 = vmatpush.bf16.msra.mxu0 %v1419
  %2573 = vmatpush.bf16.msra.mxu0 %v1417
  %2574 = vmatpush.bf16.msra.mxu0 %v1415
  %2575 = vmatpush.bf16.msra.mxu0 %v1413
  %2576 = vmatpush.bf16.msra.mxu0 %v1411
  %2577 = vmatpush.bf16.msra.mxu0 %v1409
  %2578 = vmatpush.bf16.msra.mxu0 %v1407
  %2579 = vmatpush.bf16.msra.mxu0 %v1405
  %2580 = vmatmul.bf16.gmra.mxu0 %v2236
  %v2581 = vpop.f32.mrf.mxu0
  %v2582 = vadd.f32 %v2569, %v2581
  %v2583 = vpop.f32.mrf.mxu0
  %2584 = vdwg.mxu0
  %2585 = vmatpush.bf16.msra.mxu0 %v1435
  %2586 = vmatpush.bf16.msra.mxu0 %v1433
  %2587 = vmatpush.bf16.msra.mxu0 %v1431
  %2588 = vmatpush.bf16.msra.mxu0 %v1429
  %2589 = vmatpush.bf16.msra.mxu0 %v1427
  %2590 = vmatpush.bf16.msra.mxu0 %v1425
  %2591 = vmatpush.bf16.msra.mxu0 %v1423
  %2592 = vmatpush.bf16.msra.mxu0 %v1421
  %2593 = vmatmul.bf16.gmra.mxu0 %v2237
  %v2594 = vpop.f32.mrf.mxu0
  %v2595 = vadd.f32 %v2582, %v2594
  %v2596 = vpop.f32.mrf.mxu0
  %2597 = vdwg.mxu0
  %2598 = vmatpush.bf16.msra.mxu0 %v1451
  %2599 = vmatpush.bf16.msra.mxu0 %v1449
  %2600 = vmatpush.bf16.msra.mxu0 %v1447
  %2601 = vmatpush.bf16.msra.mxu0 %v1445
  %2602 = vmatpush.bf16.msra.mxu0 %v1443
  %2603 = vmatpush.bf16.msra.mxu0 %v1441
  %2604 = vmatpush.bf16.msra.mxu0 %v1439
  %2605 = vmatpush.bf16.msra.mxu0 %v1437
  %2606 = vmatmul.bf16.gmra.mxu0 %v2238
  %v2607 = vpop.f32.mrf.mxu0
  %v2608 = vadd.f32 %v2595, %v2607
  %v2609 = vpop.f32.mrf.mxu0
  %2610 = vdwg.mxu0
  %2611 = vmatpush.bf16.msra.mxu0 %v1467
  %2612 = vmatpush.bf16.msra.mxu0 %v1465
  %2613 = vmatpush.bf16.msra.mxu0 %v1463
  %2614 = vmatpush.bf16.msra.mxu0 %v1461
  %2615 = vmatpush.bf16.msra.mxu0 %v1459
  %2616 = vmatpush.bf16.msra.mxu0 %v1457
  %2617 = vmatpush.bf16.msra.mxu0 %v1455
  %2618 = vmatpush.bf16.msra.mxu0 %v1453
  %2619 = vmatmul.bf16.gmra.mxu0 %v2239
  %v2620 = vpop.f32.mrf.mxu0
  %v2621 = vadd.f32 %v2608, %v2620
  %v2622 = vpop.f32.mrf.mxu0
  %2623 = vdwg.mxu0
  %2624 = vmatpush.bf16.msra.mxu0 %v1483
  %2625 = vmatpush.bf16.msra.mxu0 %v1481
  %2626 = vmatpush.bf16.msra.mxu0 %v1479
  %2627 = vmatpush.bf16.msra.mxu0 %v1477
  %2628 = vmatpush.bf16.msra.mxu0 %v1475
  %2629 = vmatpush.bf16.msra.mxu0 %v1473
  %2630 = vmatpush.bf16.msra.mxu0 %v1471
  %2631 = vmatpush.bf16.msra.mxu0 %v1469
  %2632 = vmatmul.bf16.gmra.mxu0 %v2240
  %v2633 = vpop.f32.mrf.mxu0
  %v2634 = vadd.f32 %v2621, %v2633
  %v2635 = vpop.f32.mrf.mxu0
  %2636 = vdwg.mxu0
  %2637 = vmatpush.bf16.msra.mxu0 %v1499
  %2638 = vmatpush.bf16.msra.mxu0 %v1497
  %2639 = vmatpush.bf16.msra.mxu0 %v1495
  %2640 = vmatpush.bf16.msra.mxu0 %v1493
  %2641 = vmatpush.bf16.msra.mxu0 %v1491
  %2642 = vmatpush.bf16.msra.mxu0 %v1489
  %2643 = vmatpush.bf16.msra.mxu0 %v1487
  %2644 = vmatpush.bf16.msra.mxu0 %v1485
  %2645 = vmatmul.bf16.gmra.mxu0 %v2241
  %v2646 = vpop.f32.mrf.mxu0
  %v2647 = vadd.f32 %v2634, %v2646
  %v2648 = vpop.f32.mrf.mxu0
  %2649 = vdwg.mxu0
  %2650 = vmatpush.bf16.msra.mxu0 %v1515
  %2651 = vmatpush.bf16.msra.mxu0 %v1513
  %2652 = vmatpush.bf16.msra.mxu0 %v1511
  %2653 = vmatpush.bf16.msra.mxu0 %v1509
  %2654 = vmatpush.bf16.msra.mxu0 %v1507
  %2655 = vmatpush.bf16.msra.mxu0 %v1505
  %2656 = vmatpush.bf16.msra.mxu0 %v1503
  %2657 = vmatpush.bf16.msra.mxu0 %v1501
  %2658 = vmatmul.bf16.gmra.mxu0 %v2242
  %v2659 = vpop.f32.mrf.mxu0
  %v2660 = vadd.f32 %v2647, %v2659
  %v2661 = vpop.f32.mrf.mxu0
  %2662 = vdwg.mxu0
  %2663 = vmatpush.bf16.msra.mxu0 %v1531
  %2664 = vmatpush.bf16.msra.mxu0 %v1529
  %2665 = vmatpush.bf16.msra.mxu0 %v1527
  %2666 = vmatpush.bf16.msra.mxu0 %v1525
  %2667 = vmatpush.bf16.msra.mxu0 %v1523
  %2668 = vmatpush.bf16.msra.mxu0 %v1521
  %2669 = vmatpush.bf16.msra.mxu0 %v1519
  %2670 = vmatpush.bf16.msra.mxu0 %v1517
  %2671 = vmatmul.bf16.gmra.mxu0 %v2243
  %v2672 = vpop.f32.mrf.mxu0
  %v2673 = vadd.f32 %v2660, %v2672
  %v2674 = vpop.f32.mrf.mxu0
  %2675 = vdwg.mxu0
  %v2676 = vrcp.pop %v2465
  %v2677 = vmul.f32 %v2465, %v2676
  %v2678 = vsub.f32 1.0, %v2677
  %v2679 = vmul.f32 %v2676, %v2678
  %v2680 = vadd.f32 %v2676, %v2679
  %vm2681 = vweird.f32 %v2465
  %vm2682 = vweird.f32 %v2676
  %vm2683 = vmor %vm2681, %vm2682
  %v2684 = vsel %vm2683, %v2676, %v2680
  %v2685 = vand.u32 2147483647, %v2465
  %vm2686 = vcmp.eq.f32.partialorder %v2685, 8.507059e+37
  %v2687 = vand.u32 %v2465, 2147483648
  %v2688 = vor.u32 1.1754944e-38, %v2687
  %v2689 = vsel %vm2686, %v2688, %v2684
  %v2690 = vmul.f32 %v2673, %v2689
  %2691 = vst [vmem:[%s2] sm:$0x1] %v2690
  // Predicated region
  $region10: #{boxes_distribution.1} parent=0 // pred_check
    _
  $region11: #{boxes_distribution.1} parent=0 // pred_check_branch
    %2693 = sbr.rel (0) target = $region13
  $region12: #{boxes_distribution.1} parent=0 // pred_region
    _
  $region13: #{boxes_distribution.1} parent=0 // pred_fallthru
    _
  // Predicated region
  $region14: #{boxes_distribution.1} parent=0 // pred_check
    _
  $region15: #{boxes_distribution.1} parent=0 // pred_check_branch
    %2695 = sbr.rel (0) target = $region17
  $region16: #{boxes_distribution.1} parent=0 // pred_region
    _
  $region17: #{boxes_distribution.1} parent=0 // pred_fallthru
    _

</llo_original>
